<compile_context>
chip_gen: v7x
topology: tpu7x:2x2x1
jax: 0.10.0
libtpu: 0.0.40
codegen_flags: <defaults>
</compile_context>

<pallas_src>
from functools import partial

import jax
import jax.numpy as jnp
from jax.experimental import pallas as pl
from jax.experimental.pallas import tpu as pltpu

NEG_SLOPE = 0.01   # F.leaky_relu default
BN_EPS = 1e-5      # nn.BatchNorm2d default


def _leaky(x):
    return jnp.where(x >= 0, x, NEG_SLOPE * x)


def _round_up(x, m):
    return ((x + m - 1) // m) * m


# ------------------------------ fused kernel ------------------------------

def make_meshconv_kernel(residual: bool, with_stats: bool, cp: int):
    """Fused MeshConv2 kernel, specialized on static structure flags.

    Ref blocks (channels-first, E on lanes):
      f_ref   : (1, 5, C_in, tE) bf16  gathered 1-ring features (already
                                       leaky+BN'd *pre-gather* for layers >= 1;
                                       "-1" neighbors gathered the zero column)
      w_ref   : (C_out, 7*Cp)    bf16  Conv2d(1,7) weight, packed host-side
      x0_ref  : (1, C_out, tE)   bf16  residual input (conv0 output)
      o_ref   : (1, C_out, tE)
      s_ref   : (1, 1, C_out, 1) f32   per-tile sum   of leaky(out)
      ss_ref  : (1, 1, C_out, 1) f32   per-tile sumsq of leaky(out)
      fs_ref  : (7*Cp, tE)       bf16  VMEM scratch: stacked derived features
    """

    def kernel(*refs):
        it = iter(refs)
        f_ref = next(it)
        w_ref = next(it)
        x0_ref = next(it) if residual else None
        o_ref = next(it)
        s_ref = next(it) if with_stats else None
        ss_ref = next(it) if with_stats else None
        fs_ref = next(it)                                   # VMEM scratch

        c_in = f_ref.shape[2]
        t_e = f_ref.shape[-1]
        zpad = (jnp.zeros((cp - c_in, t_e), jnp.bfloat16)
                if cp != c_in else None)

        def put(k, v):
            """Store derived feature k into its sublane-aligned scratch slot
            (consumed immediately -> small vreg live set)."""
            blk = v.astype(jnp.bfloat16)
            if zpad is not None:                            # pad rows read by MXU
                blk = jnp.concatenate([blk, zpad], axis=0)  # with zero weights
            fs_ref[k * cp:(k + 1) * cp, :] = blk

        # Feature 0 (self edge) is raw: store it and drop it immediately.
        put(0, f_ref[0, 0])
        # Elementwise feature construction kept in f32 (v5e VPU has no bf16 VALU,
        # and it matches the PyTorch math most closely).
        f1 = f_ref[0, 1].astype(jnp.float32)
        f2 = f_ref[0, 2].astype(jnp.float32)
        f3 = f_ref[0, 3].astype(jnp.float32)
        f4 = f_ref[0, 4].astype(jnp.float32)
        put(3, jnp.abs(f1 - f3))
        put(4, jnp.abs(f2 - f4))
        x1 = f1 + f3
        x2 = f2 + f4
        put(1, x1)
        put(2, x2)
        x5 = x1 + x2
        put(5, x5)
        avg = 0.25 * x5
        d1 = f1 - avg
        d2 = f2 - avg
        d3 = f3 - avg
        d4 = f4 - avg
        put(6, d1 * d1 + d2 * d2 + d3 * d3 + d4 * d4)

        # Conv2d(kernel=(1,7), bias=False) as ONE MXU matmul:
        # (C_out, 7*Cp) @ (7*Cp, tE), bf16 operands, f32 accumulation.
        acc = jnp.dot(w_ref[...], fs_ref[...],
                      preferred_element_type=jnp.float32)

        if residual:
            acc = _leaky(acc + x0_ref[0].astype(jnp.float32))   # x += x0; leaky
        o_ref[0] = acc.astype(o_ref.dtype)

        if with_stats:
            # Per-tile BatchNorm statistics of leaky(out); finalized (tiny) in JAX.
            z = _leaky(acc)
            s_ref[0, 0] = jnp.sum(z, axis=-1, keepdims=True)
            ss_ref[0, 0] = jnp.sum(z * z, axis=-1, keepdims=True)

    return kernel


# ------------------------------ tiling helpers ------------------------------

def _vmem_capacity_bytes():
    try:
        return int(pltpu.get_tpu_info().vmem_capacity_bytes)
    except Exception:
        return 64 << 20                       # conservative (v7x-sized) fallback


def _pick_tile_e(E, B, c_in, c_out, cp):
    """Edge-tile size (lane axis): a multiple of 128 dividing E.

    Generation aware: 128-MiB-VMEM parts (v5e/v6e) may take 1024-wide tiles;
    64-MiB v7x is capped at 512 and additionally keeps >= 8 grid steps so both
    of its TensorCores get a few pipeline stages (both grid axes are parallel).
    """
    if E % 128 != 0:
        return E                              # single full-E tile fallback
    vmem = _vmem_capacity_bytes()
    big_vmem = vmem >= (128 << 20)
    cap = 1024 if big_vmem else 512
    min_steps = 4 if big_vmem else 8
    budget = min(vmem // 4, 16 << 20)         # headroom for double-buffering

    def tile_bytes(t):
        # double-buffered gather/out/x0 blocks (bf16/f32) + bf16 feature scratch
        return 2 * (10 * c_in * t + 4 * c_out * t + 2 * c_out * t) + 14 * cp * t

    cands = [t for t in range(128, min(cap, E) + 1, 128)
             if E % t == 0 and tile_bytes(t) <= budget]
    if not cands:
        return 128
    for t in reversed(cands):
        if B * (E // t) >= min_steps:
            return t
    return cands[0]


# ------------------------------ layer wrapper -------------------------------

def fused_meshconv(f, w2, cp, *, x0=None, residual=False, with_stats=False,
                   out_dtype=jnp.bfloat16):
    """One fused MeshConv2 layer. f: (B, 5, C_in, E) bf16 gathered features.
    Returns (out, (sum, sumsq) or None)."""
    B, _, C_in, E = f.shape
    C_out = w2.shape[0]
    tE = _pick_tile_e(E, B, C_in, C_out, cp)
    n_et = E // tE

    in_specs = [
        pl.BlockSpec((1, 5, C_in, tE), lambda b, e: (b, 0, 0, e)),
        pl.BlockSpec((C_out, 7 * cp), lambda b, e: (0, 0)),
    ]
    args = [f, w2]
    if residual:
        in_specs.append(pl.BlockSpec((1, C_out, tE), lambda b, e: (b, 0, e)))
        args.append(x0)

    out_shape = [jax.ShapeDtypeStruct((B, C_out, E), out_dtype)]
    out_specs = [pl.BlockSpec((1, C_out, tE), lambda b, e: (b, 0, e))]
    if with_stats:
        for _ in range(2):   # sum / sumsq as two separate column outputs (no concat)
            out_shape.append(jax.ShapeDtypeStruct((B, n_et, C_out, 1), jnp.float32))
            out_specs.append(pl.BlockSpec((1, 1, C_out, 1),
                                          lambda b, e: (b, e, 0, 0)))

    # Explicit VMEM limit: double-buffered blocks + feature scratch + headroom.
    est = (2 * (5 * C_in * tE * 2
                + C_out * 7 * cp * 2
                + C_out * tE * jnp.dtype(out_dtype).itemsize
                + (C_out * tE * 2 if residual else 0)
                + (2 * C_out * 4 if with_stats else 0))
           + 7 * cp * tE * 2)
    vmem_limit = int(min(32 << 20, max(16 << 20, 4 * est)))

    outs = pl.pallas_call(
        make_meshconv_kernel(residual, with_stats, cp),
        out_shape=tuple(out_shape),
        grid=(B, n_et),
        in_specs=in_specs,
        out_specs=tuple(out_specs),
        scratch_shapes=[pltpu.VMEM((7 * cp, tE), jnp.bfloat16)],
        compiler_params=pltpu.CompilerParams(
            # All grid points write disjoint output blocks -> shard across both
            # TensorCores on v7x; harmless on single-TC v5e/v6e.
            dimension_semantics=("parallel", "parallel"),
            vmem_limit_bytes=vmem_limit),
    )(*args)
    if with_stats:
        return outs[0], (outs[1], outs[2])
    return outs[0], None


# ------------------------------ gather (XLA) --------------------------------

def gather_1ring(x_bce, gt):
    """1-ring gather (torch.index_select equivalent) of the (already
    leaky+BN'd, bf16) activation.
    x_bce: (B, C, E); gt: (B, 5, E) int32 indices already +1 (0 = zero pad).
    Returns (B, 5, C, E) directly -- no post-gather transpose."""
    # TODO(synk): move this gather in-kernel (activation resident in VMEM,
    # gemm table scalar-prefetched) to avoid materializing the 5x tensor in HBM.
    B, C, E = x_bce.shape
    x_pad = jnp.concatenate([jnp.zeros((B, C, 1), x_bce.dtype), x_bce], axis=2)
    return jnp.take_along_axis(x_pad[:, None, :, :], gt[:, :, None, :], axis=3)


def build_gather_index(meshes, xsz):
    """MeshConv2.pad_gemm for all meshes -> (B, 5, xsz) int32, already +1 so
    index 0 selects the zero-pad column ('-1' neighbors -> zeros, as original)."""
    rows = []
    for m in meshes:
        ec = int(m.edges_count)
        ids = jnp.arange(ec, dtype=jnp.int32)[:, None]
        pg = jnp.concatenate([ids, jnp.asarray(m.gemm_edges, jnp.int32)], axis=1)
        pg = jnp.pad(pg, ((0, xsz - ec), (0, 0)))      # pad rows with 0 (as torch)
        rows.append(pg[None])
    g = jnp.concatenate(rows, axis=0) + 1              # (B, xsz, 5)
    return jnp.transpose(g, (0, 2, 1)).astype(jnp.int32)   # (B, 5, xsz)


def conv_weight_packed(w, cp):
    """PyTorch Conv2d weight (C_out, C_in, 1, 7) -> packed bf16 (C_out, 7*Cp),
    zero-padded to match scratch slot k occupying rows [k*Cp, k*Cp + C_in)."""
    c_out, c_in = w.shape[0], w.shape[1]
    wk = jnp.transpose(w[:, :, 0, :], (0, 2, 1))       # (C_out, 7, C_in)
    wk = jnp.pad(wk, ((0, 0), (0, 0), (0, cp - c_in)))
    return wk.reshape(c_out, 7 * cp).astype(jnp.bfloat16)


# ------------------------- mesh / parameter setup --------------------------

class SyntheticMesh:
    """Minimal stand-in for a MeshCNN mesh object."""
    def __init__(self, gemm_edges, edges_count):
        self.gemm_edges = gemm_edges          # (edges_count, 4), -1 = no neighbor
        self.edges_count = int(edges_count)


def init_mresconv_params(key, in_channels, out_channels, skips):
    params = {}
    k0, key = jax.random.split(key)
    params["w0"] = 0.1 * jax.random.normal(
        k0, (out_channels, in_channels, 1, 7), jnp.float32)
    for i in range(1, skips + 1):
        ki, key = jax.random.split(key)
        params[f"w{i}"] = 0.1 * jax.random.normal(
            ki, (out_channels, out_channels, 1, 7), jnp.float32)
        params[f"gamma{i}"] = jnp.ones((out_channels,), jnp.float32)   # BN weight
        params[f"beta{i}"] = jnp.zeros((out_channels,), jnp.float32)   # BN bias
    return params


# ------------------------------- forward -----------------------------------

@partial(jax.jit, static_argnames=("skips",))
def _mresconv_impl(params, x_nchw, gt, skips):
    B, C_in, E, _ = x_nchw.shape
    C_out = params["w0"].shape[0]
    n = float(B * E)
    cp_in = _round_up(C_in, 16)       # bf16-sublane-tile aligned scratch slots
    cp_mid = _round_up(C_out, 16)

    # conv0: raw (bf16) gather, no prologue; epilogue emits BN stats for bn1.
    x = x_nchw[..., 0].astype(jnp.bfloat16)                      # (B, C_in, E)
    x0, stats = fused_meshconv(gather_1ring(x, gt),
                               conv_weight_packed(params["w0"], cp_in),
                               cp_in, with_stats=True)
    xc = x0
    for i in range(1, skips + 1):
        # Finalize BatchNorm_i (train-mode batch stats over the padded edge dim).
        ssum, ssq = stats
        s = jnp.sum(ssum[..., 0], axis=(0, 1))
        ss = jnp.sum(ssq[..., 0], axis=(0, 1))
        mean = s / n
        # TODO(synk): E[x^2]-E[x]^2 can cancel for large channel means; a shifted
        # two-pass finalize would be more robust.
        var = jnp.maximum(ss / n - mean * mean, 0.0)
        inv = jax.lax.rsqrt(var + BN_EPS)
        scale = params[f"gamma{i}"] * inv
        shift = params[f"beta{i}"] - mean * scale

        # Pre-gather prologue: leaky_relu + folded BN affine + bf16 downcast,
        # applied ONCE on (B,C,E) (not on 5 gathered copies); "-1" neighbors then
        # gather the zero pad column of this BN'd activation, as the original.
        xb = (scale[None, :, None] * _leaky(xc.astype(jnp.float32))
              + shift[None, :, None]).astype(jnp.bfloat16)

        last = i == skips
        xc, stats = fused_meshconv(
            gather_1ring(xb, gt), conv_weight_packed(params[f"w{i}"], cp_mid),
            cp_mid, x0=x0 if last else None, residual=last,
            with_stats=not last,
            out_dtype=jnp.float32 if last else jnp.bfloat16)
    return xc[..., None]                                         # (B, C_out, E, 1)


def mresconv_forward(params, x_nchw, meshes, skips):
    """x_nchw: (B, C_in, E, 1) -> (B, C_out, E, 1)"""
    assert skips >= 1
    E = x_nchw.shape[2]
    gt = build_gather_index(meshes, E)                           # (B, 5, E) int32
    return _mresconv_impl(params, x_nchw, gt, skips)


# --------------------------------- main ------------------------------------

if __name__ == "__main__":
    key = jax.random.PRNGKey(0)
    B, C_in, C_out, E, skips = 2, 4, 8, 1024, 1
    kx, kg1, kg2, kp = jax.random.split(key, 4)

    x = jax.random.normal(kx, (B, C_in, E, 1), jnp.float32)
    # gemm indices in [-1, edges_count): -1 marks missing neighbors (boundary edges)
    meshes = [
        SyntheticMesh(jax.random.randint(kg1, (E, 4), -1, E), E),
        SyntheticMesh(jax.random.randint(kg2, (E - 24, 4), -1, E - 24), E - 24),
    ]
    params = init_mresconv_params(kp, C_in, C_out, skips)

    out = mresconv_forward(params, x, meshes, skips)
    out = jax.block_until_ready(out)

    assert out.shape == (B, C_out, E, 1), out.shape
    assert bool(jnp.all(jnp.isfinite(out)))
    print("KERNEL_OK")
</pallas_src>

<mosaic_0001>
module attributes {stable_mosaic.version = 11 : i64} {
  func.func @kernel(%arg0: i32, %arg1: i32, %arg2: memref<1x5x4x256xbf16, #tpu.memory_space<vmem>>, %arg3: memref<8x112xbf16, #tpu.memory_space<vmem>>, %arg4: memref<1x8x256xbf16, #tpu.memory_space<vmem>>, %arg5: memref<1x1x8x1xf32, #tpu.memory_space<vmem>>, %arg6: memref<1x1x8x1xf32, #tpu.memory_space<vmem>>, %arg7: memref<112x256xbf16, #tpu.memory_space<vmem>>) attributes {dimension_semantics = [#tpu.dimension_semantics<parallel>, #tpu.dimension_semantics<parallel>], iteration_bounds = array<i64: 2, 4>, scalar_prefetch = 0 : i64, scratch_operands = 1 : i64, tpu.core_type = #tpu.core_type<tc>, window_params = [{transform_indices = @transform_0, window_bounds = array<i64: 1, 5, 4, 256>}, {pipeline_mode = #tpu.pipeline_mode<synchronous>, transform_indices = @transform_1, window_bounds = array<i64: 8, 112>}, {transform_indices = @transform_2, window_bounds = array<i64: 1, 8, 256>}, {transform_indices = @transform_3, window_bounds = array<i64: 1, 1, 8, 1>}, {transform_indices = @transform_4, window_bounds = array<i64: 1, 1, 8, 1>}]} {
    %cst = arith.constant 0.000000e+00 : bf16
    %0 = vector.broadcast %cst : bf16 to vector<12x256xbf16>
    %c0 = arith.constant 0 : index
    %c0_0 = arith.constant 0 : index
    %c0_1 = arith.constant 0 : index
    %c0_2 = arith.constant 0 : index
    %1 = vector.load %arg2[%c0, %c0_0, %c0_1, %c0_2] : memref<1x5x4x256xbf16, #tpu.memory_space<vmem>>, vector<1x1x4x256xbf16>
    %2 = vector.shape_cast %1 : vector<1x1x4x256xbf16> to vector<4x256xbf16>
    %3 = tpu.concatenate %2, %0 in 0 : vector<4x256xbf16>, vector<12x256xbf16> -> vector<16x256xbf16>
    %c0_3 = arith.constant 0 : index
    %c0_4 = arith.constant 0 : index
    %4 = vector.load %arg7[%c0_3, %c0_4] : memref<112x256xbf16, #tpu.memory_space<vmem>>, vector<16x256xbf16>
    tpu.vector_store %arg7[%c0_3, %c0_4], %3 {strides = array<i32>} : memref<112x256xbf16, #tpu.memory_space<vmem>>, vector<16x256xbf16>,
    %c0_5 = arith.constant 0 : index
    %c1 = arith.constant 1 : index
    %c0_6 = arith.constant 0 : index
    %c0_7 = arith.constant 0 : index
    %5 = vector.load %arg2[%c0_5, %c1, %c0_6, %c0_7] : memref<1x5x4x256xbf16, #tpu.memory_space<vmem>>, vector<1x1x4x256xbf16>
    %6 = vector.shape_cast %5 : vector<1x1x4x256xbf16> to vector<4x256xbf16>
    %7 = arith.extf %6 : vector<4x256xbf16> to vector<4x256xf32>
    %c0_8 = arith.constant 0 : index
    %c2 = arith.constant 2 : index
    %c0_9 = arith.constant 0 : index
    %c0_10 = arith.constant 0 : index
    %8 = vector.load %arg2[%c0_8, %c2, %c0_9, %c0_10] : memref<1x5x4x256xbf16, #tpu.memory_space<vmem>>, vector<1x1x4x256xbf16>
    %9 = vector.shape_cast %8 : vector<1x1x4x256xbf16> to vector<4x256xbf16>
    %10 = arith.extf %9 : vector<4x256xbf16> to vector<4x256xf32>
    %c0_11 = arith.constant 0 : index
    %c3 = arith.constant 3 : index
    %c0_12 = arith.constant 0 : index
    %c0_13 = arith.constant 0 : index
    %11 = vector.load %arg2[%c0_11, %c3, %c0_12, %c0_13] : memref<1x5x4x256xbf16, #tpu.memory_space<vmem>>, vector<1x1x4x256xbf16>
    %12 = vector.shape_cast %11 : vector<1x1x4x256xbf16> to vector<4x256xbf16>
    %13 = arith.extf %12 : vector<4x256xbf16> to vector<4x256xf32>
    %c0_14 = arith.constant 0 : index
    %c4 = arith.constant 4 : index
    %c0_15 = arith.constant 0 : index
    %c0_16 = arith.constant 0 : index
    %14 = vector.load %arg2[%c0_14, %c4, %c0_15, %c0_16] : memref<1x5x4x256xbf16, #tpu.memory_space<vmem>>, vector<1x1x4x256xbf16>
    %15 = vector.shape_cast %14 : vector<1x1x4x256xbf16> to vector<4x256xbf16>
    %16 = arith.extf %15 : vector<4x256xbf16> to vector<4x256xf32>
    %17 = arith.subf %7, %13 : vector<4x256xf32>
    %18 = math.absf %17 : vector<4x256xf32>
    %19 = arith.truncf %18 : vector<4x256xf32> to vector<4x256xbf16>
    %20 = tpu.concatenate %19, %0 in 0 : vector<4x256xbf16>, vector<12x256xbf16> -> vector<16x256xbf16>
    %c48 = arith.constant 48 : index
    %c0_17 = arith.constant 0 : index
    %21 = vector.load %arg7[%c48, %c0_17] : memref<112x256xbf16, #tpu.memory_space<vmem>>, vector<16x256xbf16>
    tpu.vector_store %arg7[%c48, %c0_17], %20 {strides = array<i32>} : memref<112x256xbf16, #tpu.memory_space<vmem>>, vector<16x256xbf16>,
    %22 = arith.subf %10, %16 : vector<4x256xf32>
    %23 = math.absf %22 : vector<4x256xf32>
    %24 = arith.truncf %23 : vector<4x256xf32> to vector<4x256xbf16>
    %25 = tpu.concatenate %24, %0 in 0 : vector<4x256xbf16>, vector<12x256xbf16> -> vector<16x256xbf16>
    %c64 = arith.constant 64 : index
    %c0_18 = arith.constant 0 : index
    %26 = vector.load %arg7[%c64, %c0_18] : memref<112x256xbf16, #tpu.memory_space<vmem>>, vector<16x256xbf16>
    tpu.vector_store %arg7[%c64, %c0_18], %25 {strides = array<i32>} : memref<112x256xbf16, #tpu.memory_space<vmem>>, vector<16x256xbf16>,
    %27 = arith.addf %7, %13 : vector<4x256xf32>
    %28 = arith.addf %10, %16 : vector<4x256xf32>
    %29 = arith.truncf %27 : vector<4x256xf32> to vector<4x256xbf16>
    %30 = tpu.concatenate %29, %0 in 0 : vector<4x256xbf16>, vector<12x256xbf16> -> vector<16x256xbf16>
    %c16 = arith.constant 16 : index
    %c0_19 = arith.constant 0 : index
    %31 = vector.load %arg7[%c16, %c0_19] : memref<112x256xbf16, #tpu.memory_space<vmem>>, vector<16x256xbf16>
    tpu.vector_store %arg7[%c16, %c0_19], %30 {strides = array<i32>} : memref<112x256xbf16, #tpu.memory_space<vmem>>, vector<16x256xbf16>,
    %32 = arith.truncf %28 : vector<4x256xf32> to vector<4x256xbf16>
    %33 = tpu.concatenate %32, %0 in 0 : vector<4x256xbf16>, vector<12x256xbf16> -> vector<16x256xbf16>
    %c32 = arith.constant 32 : index
    %c0_20 = arith.constant 0 : index
    %34 = vector.load %arg7[%c32, %c0_20] : memref<112x256xbf16, #tpu.memory_space<vmem>>, vector<16x256xbf16>
    tpu.vector_store %arg7[%c32, %c0_20], %33 {strides = array<i32>} : memref<112x256xbf16, #tpu.memory_space<vmem>>, vector<16x256xbf16>,
    %35 = arith.addf %27, %28 : vector<4x256xf32>
    %36 = arith.truncf %35 : vector<4x256xf32> to vector<4x256xbf16>
    %37 = tpu.concatenate %36, %0 in 0 : vector<4x256xbf16>, vector<12x256xbf16> -> vector<16x256xbf16>
    %c80 = arith.constant 80 : index
    %c0_21 = arith.constant 0 : index
    %38 = vector.load %arg7[%c80, %c0_21] : memref<112x256xbf16, #tpu.memory_space<vmem>>, vector<16x256xbf16>
    tpu.vector_store %arg7[%c80, %c0_21], %37 {strides = array<i32>} : memref<112x256xbf16, #tpu.memory_space<vmem>>, vector<16x256xbf16>,
    %cst_22 = arith.constant 2.500000e-01 : f32
    %39 = vector.broadcast %cst_22 : f32 to vector<4x256xf32>
    %40 = arith.mulf %39, %35 : vector<4x256xf32>
    %41 = arith.subf %7, %40 : vector<4x256xf32>
    %42 = arith.subf %10, %40 : vector<4x256xf32>
    %43 = arith.subf %13, %40 : vector<4x256xf32>
    %44 = arith.subf %16, %40 : vector<4x256xf32>
    %45 = arith.mulf %41, %41 : vector<4x256xf32>
    %46 = arith.mulf %42, %42 : vector<4x256xf32>
    %47 = arith.addf %45, %46 : vector<4x256xf32>
    %48 = arith.mulf %43, %43 : vector<4x256xf32>
    %49 = arith.addf %47, %48 : vector<4x256xf32>
    %50 = arith.mulf %44, %44 : vector<4x256xf32>
    %51 = arith.addf %49, %50 : vector<4x256xf32>
    %52 = arith.truncf %51 : vector<4x256xf32> to vector<4x256xbf16>
    %53 = tpu.concatenate %52, %0 in 0 : vector<4x256xbf16>, vector<12x256xbf16> -> vector<16x256xbf16>
    %c96 = arith.constant 96 : index
    %c0_23 = arith.constant 0 : index
    %54 = vector.load %arg7[%c96, %c0_23] : memref<112x256xbf16, #tpu.memory_space<vmem>>, vector<16x256xbf16>
    tpu.vector_store %arg7[%c96, %c0_23], %53 {strides = array<i32>} : memref<112x256xbf16, #tpu.memory_space<vmem>>, vector<16x256xbf16>,
    %c0_24 = arith.constant 0 : index
    %c0_25 = arith.constant 0 : index
    %55 = vector.load %arg3[%c0_24, %c0_25] : memref<8x112xbf16, #tpu.memory_space<vmem>>, vector<8x112xbf16>
    %c0_26 = arith.constant 0 : index
    %c0_27 = arith.constant 0 : index
    %56 = vector.load %arg7[%c0_26, %c0_27] : memref<112x256xbf16, #tpu.memory_space<vmem>>, vector<112x256xbf16>
    %cst_28 = arith.constant dense<0.000000e+00> : vector<8x256xf32>
    %57 = tpu.matmul %55, %56, %cst_28 {dimension_numbers = #tpu.dot_dimension_numbers<[1], [0], [0], [1], [0, 0, 1, 1], [], []>} : vector<8x112xbf16>, vector<112x256xbf16>, vector<8x256xf32> -> vector<8x256xf32>
    %58 = arith.truncf %57 : vector<8x256xf32> to vector<8x256xbf16>
    %c0_29 = arith.constant 0 : index
    %c0_30 = arith.constant 0 : index
    %c0_31 = arith.constant 0 : index
    %59 = vector.load %arg4[%c0_29, %c0_30, %c0_31] : memref<1x8x256xbf16, #tpu.memory_space<vmem>>, vector<1x8x256xbf16>
    %60 = vector.shape_cast %59 : vector<1x8x256xbf16> to vector<8x256xbf16>
    %61 = vector.shape_cast %58 : vector<8x256xbf16> to vector<1x8x256xbf16>
    tpu.vector_store %arg4[%c0_29, %c0_30, %c0_31], %61 {strides = array<i32>} : memref<1x8x256xbf16, #tpu.memory_space<vmem>>, vector<1x8x256xbf16>,
    %cst_32 = arith.constant 0.000000e+00 : f32
    %62 = vector.broadcast %cst_32 : f32 to vector<8x256xf32>
    %63 = arith.cmpf oge, %57, %62 : vector<8x256xf32>
    %cst_33 = arith.constant 0.00999999977 : f32
    %64 = vector.broadcast %cst_33 : f32 to vector<8x256xf32>
    %65 = arith.mulf %64, %57 : vector<8x256xf32>
    %66 = arith.select %63, %57, %65 : vector<8x256xi1>, vector<8x256xf32>
    %cst_34 = arith.constant dense<0.000000e+00> : vector<8xf32>
    %67 = vector.multi_reduction <add>, %66, %cst_34 [1] : vector<8x256xf32> to vector<8xf32>
    %68 = vector.shape_cast %67 : vector<8xf32> to vector<8x1xf32>
    %c0_35 = arith.constant 0 : index
    %c0_36 = arith.constant 0 : index
    %c0_37 = arith.constant 0 : index
    %c0_38 = arith.constant 0 : index
    %69 = vector.load %arg5[%c0_35, %c0_36, %c0_37, %c0_38] : memref<1x1x8x1xf32, #tpu.memory_space<vmem>>, vector<1x1x8x1xf32>
    %70 = vector.shape_cast %69 : vector<1x1x8x1xf32> to vector<8x1xf32>
    %71 = vector.shape_cast %68 : vector<8x1xf32> to vector<1x1x8x1xf32>
    tpu.vector_store %arg5[%c0_35, %c0_36, %c0_37, %c0_38], %71 {strides = array<i32>} : memref<1x1x8x1xf32, #tpu.memory_space<vmem>>, vector<1x1x8x1xf32>,
    %72 = arith.mulf %66, %66 : vector<8x256xf32>
    %cst_39 = arith.constant dense<0.000000e+00> : vector<8xf32>
    %73 = vector.multi_reduction <add>, %72, %cst_39 [1] : vector<8x256xf32> to vector<8xf32>
    %74 = vector.shape_cast %73 : vector<8xf32> to vector<8x1xf32>
    %c0_40 = arith.constant 0 : index
    %c0_41 = arith.constant 0 : index
    %c0_42 = arith.constant 0 : index
    %c0_43 = arith.constant 0 : index
    %75 = vector.load %arg6[%c0_40, %c0_41, %c0_42, %c0_43] : memref<1x1x8x1xf32, #tpu.memory_space<vmem>>, vector<1x1x8x1xf32>
    %76 = vector.shape_cast %75 : vector<1x1x8x1xf32> to vector<8x1xf32>
    %77 = vector.shape_cast %74 : vector<8x1xf32> to vector<1x1x8x1xf32>
    tpu.vector_store %arg6[%c0_40, %c0_41, %c0_42, %c0_43], %77 {strides = array<i32>} : memref<1x1x8x1xf32, #tpu.memory_space<vmem>>, vector<1x1x8x1xf32>,
    return
  }
  func.func @transform_0(%arg0: i32, %arg1: i32) -> (i32, i32, i32, i32) {
    %c0_i32 = arith.constant 0 : i32
    %c0_i32_0 = arith.constant 0 : i32
    %c0_i32_1 = arith.constant 0 : i32
    return %arg0, %c0_i32, %c0_i32_0, %arg1 : i32, i32, i32, i32
  }
  func.func @transform_1(%arg0: i32, %arg1: i32) -> (i32, i32) {
    %c0_i32 = arith.constant 0 : i32
    %c0_i32_0 = arith.constant 0 : i32
    %c0_i32_1 = arith.constant 0 : i32
    return %c0_i32, %c0_i32_0 : i32, i32
  }
  func.func @transform_2(%arg0: i32, %arg1: i32) -> (i32, i32, i32) {
    %c0_i32 = arith.constant 0 : i32
    %c0_i32_0 = arith.constant 0 : i32
    return %arg0, %c0_i32, %arg1 : i32, i32, i32
  }
  func.func @transform_3(%arg0: i32, %arg1: i32) -> (i32, i32, i32, i32) {
    %c0_i32 = arith.constant 0 : i32
    %c0_i32_0 = arith.constant 0 : i32
    %c0_i32_1 = arith.constant 0 : i32
    return %arg0, %arg1, %c0_i32, %c0_i32_0 : i32, i32, i32, i32
  }
  func.func @transform_4(%arg0: i32, %arg1: i32) -> (i32, i32, i32, i32) {
    %c0_i32 = arith.constant 0 : i32
    %c0_i32_0 = arith.constant 0 : i32
    %c0_i32_1 = arith.constant 0 : i32
    return %arg0, %arg1, %c0_i32, %c0_i32_0 : i32, i32, i32, i32
  }
}

module attributes {stable_mosaic.version = 11 : i64} {
  func.func @kernel(%arg0: i32, %arg1: i32, %arg2: memref<1x5x8x256xbf16, #tpu.memory_space<vmem>>, %arg3: memref<8x112xbf16, #tpu.memory_space<vmem>>, %arg4: memref<1x8x256xbf16, #tpu.memory_space<vmem>>, %arg5: memref<1x8x256xf32, #tpu.memory_space<vmem>>, %arg6: memref<112x256xbf16, #tpu.memory_space<vmem>>) attributes {dimension_semantics = [#tpu.dimension_semantics<parallel>, #tpu.dimension_semantics<parallel>], iteration_bounds = array<i64: 2, 4>, scalar_prefetch = 0 : i64, scratch_operands = 1 : i64, tpu.core_type = #tpu.core_type<tc>, window_params = [{transform_indices = @transform_0, window_bounds = array<i64: 1, 5, 8, 256>}, {pipeline_mode = #tpu.pipeline_mode<synchronous>, transform_indices = @transform_1, window_bounds = array<i64: 8, 112>}, {transform_indices = @transform_2, window_bounds = array<i64: 1, 8, 256>}, {transform_indices = @transform_3, window_bounds = array<i64: 1, 8, 256>}]} {
    %cst = arith.constant 0.000000e+00 : bf16
    %0 = vector.broadcast %cst : bf16 to vector<8x256xbf16>
    %c0 = arith.constant 0 : index
    %c0_0 = arith.constant 0 : index
    %c0_1 = arith.constant 0 : index
    %c0_2 = arith.constant 0 : index
    %1 = vector.load %arg2[%c0, %c0_0, %c0_1, %c0_2] : memref<1x5x8x256xbf16, #tpu.memory_space<vmem>>, vector<1x1x8x256xbf16>
    %2 = vector.shape_cast %1 : vector<1x1x8x256xbf16> to vector<8x256xbf16>
    %3 = tpu.concatenate %2, %0 in 0 : vector<8x256xbf16>, vector<8x256xbf16> -> vector<16x256xbf16>
    %c0_3 = arith.constant 0 : index
    %c0_4 = arith.constant 0 : index
    %4 = vector.load %arg6[%c0_3, %c0_4] : memref<112x256xbf16, #tpu.memory_space<vmem>>, vector<16x256xbf16>
    tpu.vector_store %arg6[%c0_3, %c0_4], %3 {strides = array<i32>} : memref<112x256xbf16, #tpu.memory_space<vmem>>, vector<16x256xbf16>,
    %c0_5 = arith.constant 0 : index
    %c1 = arith.constant 1 : index
    %c0_6 = arith.constant 0 : index
    %c0_7 = arith.constant 0 : index
    %5 = vector.load %arg2[%c0_5, %c1, %c0_6, %c0_7] : memref<1x5x8x256xbf16, #tpu.memory_space<vmem>>, vector<1x1x8x256xbf16>
    %6 = vector.shape_cast %5 : vector<1x1x8x256xbf16> to vector<8x256xbf16>
    %7 = arith.extf %6 : vector<8x256xbf16> to vector<8x256xf32>
    %c0_8 = arith.constant 0 : index
    %c2 = arith.constant 2 : index
    %c0_9 = arith.constant 0 : index
    %c0_10 = arith.constant 0 : index
    %8 = vector.load %arg2[%c0_8, %c2, %c0_9, %c0_10] : memref<1x5x8x256xbf16, #tpu.memory_space<vmem>>, vector<1x1x8x256xbf16>
    %9 = vector.shape_cast %8 : vector<1x1x8x256xbf16> to vector<8x256xbf16>
    %10 = arith.extf %9 : vector<8x256xbf16> to vector<8x256xf32>
    %c0_11 = arith.constant 0 : index
    %c3 = arith.constant 3 : index
    %c0_12 = arith.constant 0 : index
    %c0_13 = arith.constant 0 : index
    %11 = vector.load %arg2[%c0_11, %c3, %c0_12, %c0_13] : memref<1x5x8x256xbf16, #tpu.memory_space<vmem>>, vector<1x1x8x256xbf16>
    %12 = vector.shape_cast %11 : vector<1x1x8x256xbf16> to vector<8x256xbf16>
    %13 = arith.extf %12 : vector<8x256xbf16> to vector<8x256xf32>
    %c0_14 = arith.constant 0 : index
    %c4 = arith.constant 4 : index
    %c0_15 = arith.constant 0 : index
    %c0_16 = arith.constant 0 : index
    %14 = vector.load %arg2[%c0_14, %c4, %c0_15, %c0_16] : memref<1x5x8x256xbf16, #tpu.memory_space<vmem>>, vector<1x1x8x256xbf16>
    %15 = vector.shape_cast %14 : vector<1x1x8x256xbf16> to vector<8x256xbf16>
    %16 = arith.extf %15 : vector<8x256xbf16> to vector<8x256xf32>
    %17 = arith.subf %7, %13 : vector<8x256xf32>
    %18 = math.absf %17 : vector<8x256xf32>
    %19 = arith.truncf %18 : vector<8x256xf32> to vector<8x256xbf16>
    %20 = tpu.concatenate %19, %0 in 0 : vector<8x256xbf16>, vector<8x256xbf16> -> vector<16x256xbf16>
    %c48 = arith.constant 48 : index
    %c0_17 = arith.constant 0 : index
    %21 = vector.load %arg6[%c48, %c0_17] : memref<112x256xbf16, #tpu.memory_space<vmem>>, vector<16x256xbf16>
    tpu.vector_store %arg6[%c48, %c0_17], %20 {strides = array<i32>} : memref<112x256xbf16, #tpu.memory_space<vmem>>, vector<16x256xbf16>,
    %22 = arith.subf %10, %16 : vector<8x256xf32>
    %23 = math.absf %22 : vector<8x256xf32>
    %24 = arith.truncf %23 : vector<8x256xf32> to vector<8x256xbf16>
    %25 = tpu.concatenate %24, %0 in 0 : vector<8x256xbf16>, vector<8x256xbf16> -> vector<16x256xbf16>
    %c64 = arith.constant 64 : index
    %c0_18 = arith.constant 0 : index
    %26 = vector.load %arg6[%c64, %c0_18] : memref<112x256xbf16, #tpu.memory_space<vmem>>, vector<16x256xbf16>
    tpu.vector_store %arg6[%c64, %c0_18], %25 {strides = array<i32>} : memref<112x256xbf16, #tpu.memory_space<vmem>>, vector<16x256xbf16>,
    %27 = arith.addf %7, %13 : vector<8x256xf32>
    %28 = arith.addf %10, %16 : vector<8x256xf32>
    %29 = arith.truncf %27 : vector<8x256xf32> to vector<8x256xbf16>
    %30 = tpu.concatenate %29, %0 in 0 : vector<8x256xbf16>, vector<8x256xbf16> -> vector<16x256xbf16>
    %c16 = arith.constant 16 : index
    %c0_19 = arith.constant 0 : index
    %31 = vector.load %arg6[%c16, %c0_19] : memref<112x256xbf16, #tpu.memory_space<vmem>>, vector<16x256xbf16>
    tpu.vector_store %arg6[%c16, %c0_19], %30 {strides = array<i32>} : memref<112x256xbf16, #tpu.memory_space<vmem>>, vector<16x256xbf16>,
    %32 = arith.truncf %28 : vector<8x256xf32> to vector<8x256xbf16>
    %33 = tpu.concatenate %32, %0 in 0 : vector<8x256xbf16>, vector<8x256xbf16> -> vector<16x256xbf16>
    %c32 = arith.constant 32 : index
    %c0_20 = arith.constant 0 : index
    %34 = vector.load %arg6[%c32, %c0_20] : memref<112x256xbf16, #tpu.memory_space<vmem>>, vector<16x256xbf16>
    tpu.vector_store %arg6[%c32, %c0_20], %33 {strides = array<i32>} : memref<112x256xbf16, #tpu.memory_space<vmem>>, vector<16x256xbf16>,
    %35 = arith.addf %27, %28 : vector<8x256xf32>
    %36 = arith.truncf %35 : vector<8x256xf32> to vector<8x256xbf16>
    %37 = tpu.concatenate %36, %0 in 0 : vector<8x256xbf16>, vector<8x256xbf16> -> vector<16x256xbf16>
    %c80 = arith.constant 80 : index
    %c0_21 = arith.constant 0 : index
    %38 = vector.load %arg6[%c80, %c0_21] : memref<112x256xbf16, #tpu.memory_space<vmem>>, vector<16x256xbf16>
    tpu.vector_store %arg6[%c80, %c0_21], %37 {strides = array<i32>} : memref<112x256xbf16, #tpu.memory_space<vmem>>, vector<16x256xbf16>,
    %cst_22 = arith.constant 2.500000e-01 : f32
    %39 = vector.broadcast %cst_22 : f32 to vector<8x256xf32>
    %40 = arith.mulf %39, %35 : vector<8x256xf32>
    %41 = arith.subf %7, %40 : vector<8x256xf32>
    %42 = arith.subf %10, %40 : vector<8x256xf32>
    %43 = arith.subf %13, %40 : vector<8x256xf32>
    %44 = arith.subf %16, %40 : vector<8x256xf32>
    %45 = arith.mulf %41, %41 : vector<8x256xf32>
    %46 = arith.mulf %42, %42 : vector<8x256xf32>
    %47 = arith.addf %45, %46 : vector<8x256xf32>
    %48 = arith.mulf %43, %43 : vector<8x256xf32>
    %49 = arith.addf %47, %48 : vector<8x256xf32>
    %50 = arith.mulf %44, %44 : vector<8x256xf32>
    %51 = arith.addf %49, %50 : vector<8x256xf32>
    %52 = arith.truncf %51 : vector<8x256xf32> to vector<8x256xbf16>
    %53 = tpu.concatenate %52, %0 in 0 : vector<8x256xbf16>, vector<8x256xbf16> -> vector<16x256xbf16>
    %c96 = arith.constant 96 : index
    %c0_23 = arith.constant 0 : index
    %54 = vector.load %arg6[%c96, %c0_23] : memref<112x256xbf16, #tpu.memory_space<vmem>>, vector<16x256xbf16>
    tpu.vector_store %arg6[%c96, %c0_23], %53 {strides = array<i32>} : memref<112x256xbf16, #tpu.memory_space<vmem>>, vector<16x256xbf16>,
    %c0_24 = arith.constant 0 : index
    %c0_25 = arith.constant 0 : index
    %55 = vector.load %arg3[%c0_24, %c0_25] : memref<8x112xbf16, #tpu.memory_space<vmem>>, vector<8x112xbf16>
    %c0_26 = arith.constant 0 : index
    %c0_27 = arith.constant 0 : index
    %56 = vector.load %arg6[%c0_26, %c0_27] : memref<112x256xbf16, #tpu.memory_space<vmem>>, vector<112x256xbf16>
    %cst_28 = arith.constant dense<0.000000e+00> : vector<8x256xf32>
    %57 = tpu.matmul %55, %56, %cst_28 {dimension_numbers = #tpu.dot_dimension_numbers<[1], [0], [0], [1], [0, 0, 1, 1], [], []>} : vector<8x112xbf16>, vector<112x256xbf16>, vector<8x256xf32> -> vector<8x256xf32>
    %c0_29 = arith.constant 0 : index
    %c0_30 = arith.constant 0 : index
    %c0_31 = arith.constant 0 : index
    %58 = vector.load %arg4[%c0_29, %c0_30, %c0_31] : memref<1x8x256xbf16, #tpu.memory_space<vmem>>, vector<1x8x256xbf16>
    %59 = vector.shape_cast %58 : vector<1x8x256xbf16> to vector<8x256xbf16>
    %60 = arith.extf %59 : vector<8x256xbf16> to vector<8x256xf32>
    %61 = arith.addf %57, %60 : vector<8x256xf32>
    %cst_32 = arith.constant 0.000000e+00 : f32
    %62 = vector.broadcast %cst_32 : f32 to vector<8x256xf32>
    %63 = arith.cmpf oge, %61, %62 : vector<8x256xf32>
    %cst_33 = arith.constant 0.00999999977 : f32
    %64 = vector.broadcast %cst_33 : f32 to vector<8x256xf32>
    %65 = arith.mulf %64, %61 : vector<8x256xf32>
    %66 = arith.select %63, %61, %65 : vector<8x256xi1>, vector<8x256xf32>
    %c0_34 = arith.constant 0 : index
    %c0_35 = arith.constant 0 : index
    %c0_36 = arith.constant 0 : index
    %67 = vector.load %arg5[%c0_34, %c0_35, %c0_36] : memref<1x8x256xf32, #tpu.memory_space<vmem>>, vector<1x8x256xf32>
    %68 = vector.shape_cast %67 : vector<1x8x256xf32> to vector<8x256xf32>
    %69 = vector.shape_cast %66 : vector<8x256xf32> to vector<1x8x256xf32>
    tpu.vector_store %arg5[%c0_34, %c0_35, %c0_36], %69 {strides = array<i32>} : memref<1x8x256xf32, #tpu.memory_space<vmem>>, vector<1x8x256xf32>,
    return
  }
  func.func @transform_0(%arg0: i32, %arg1: i32) -> (i32, i32, i32, i32) {
    %c0_i32 = arith.constant 0 : i32
    %c0_i32_0 = arith.constant 0 : i32
    %c0_i32_1 = arith.constant 0 : i32
    return %arg0, %c0_i32, %c0_i32_0, %arg1 : i32, i32, i32, i32
  }
  func.func @transform_1(%arg0: i32, %arg1: i32) -> (i32, i32) {
    %c0_i32 = arith.constant 0 : i32
    %c0_i32_0 = arith.constant 0 : i32
    %c0_i32_1 = arith.constant 0 : i32
    return %c0_i32, %c0_i32_0 : i32, i32
  }
  func.func @transform_2(%arg0: i32, %arg1: i32) -> (i32, i32, i32) {
    %c0_i32 = arith.constant 0 : i32
    %c0_i32_0 = arith.constant 0 : i32
    return %arg0, %c0_i32, %arg1 : i32, i32, i32
  }
  func.func @transform_3(%arg0: i32, %arg1: i32) -> (i32, i32, i32) {
    %c0_i32 = arith.constant 0 : i32
    %c0_i32_0 = arith.constant 0 : i32
    return %arg0, %c0_i32, %arg1 : i32, i32, i32
  }
}

</mosaic_0001>

<llo_original>
// kernel: _mresconv_impl.2
$region0: #{_mresconv_impl.2}
  #allocation0 [shape = 'u32[]', space=smem, size = 0x4, offset = 0x4, fixed_abs, tag = 'smem constant byte address 0x4 - core index']
  #allocation1 [shape = 'u32[144,128]{1,0:T(1,128)}', space=vmem, size = 0x12000, scoped, tag = 'internal scratch']
  #allocation2 [shape = 'bf16[112,256]{1,0:T(16,128)(2,1)}', space=vmem, size = 0xe000, scoped, tag = 'scratch operand']
  %s0 = inlined_call_operand.vmem [shape: bf16[2,5,4,1024], index: 0, kind: input, shape index: {}]
  %s1 = inlined_call_operand.vmem [shape: bf16[8,112], index: 1, kind: input, shape index: {}]
  %s2 = inlined_call_operand.vmem [shape: bf16[2,8,1024], index: 2, kind: output, shape index: {0}]
  %s3 = inlined_call_operand.vmem [shape: f32[2,4,8,1], index: 3, kind: output, shape index: {1}]
  %s4 = inlined_call_operand.vmem [shape: f32[2,4,8,1], index: 4, kind: output, shape index: {2}]
  %5 = xla_tuple %s2, %s3, %s4
  %s6 = sld [smem:[#allocation0]]
  $region98: #{_mresconv_impl.2} parent=0
    _
  %s8 = ssub.s32 1, %s6
  %s9 = scalar_select 0, %s8, %s6
  $region1: #{_mresconv_impl.2} parent=0
    #allocation3 [shape = 'u8[20480]{0}', space=vmem, size = 0x5000, scoped, tag = 'input window, operand 0']
    loop: start=0, step=1, limit=10
    $region2: #{_mresconv_impl.2} parent=1 // loop_pre_header
      _
    $region3: #{_mresconv_impl.2} parent=1 // loop_header
      %s11 = sphi 0, %s15
      %p12 = scmp.ge.s32.totalorder %s11, 10
      %s18 = sphi 0, %s30
      %s19 = sphi 0, %s26
      %s20 = sphi 0, %s18
      %s21 = sphi 0, %s19
      %s22 = sphi 0, %s20
      %s23 = sphi 0, %s21
      %s35 = sphi 0, %s37
      %s38 = sphi 0, %s35
      %s39 = sphi 0, %s38
      %s55 = sphi 0, %s39
      %s59 = sphi 0, %s59
      %s61 = sphi 0, %s59
      %s62 = sphi 0, %s61
      %s76 = sphi 0, %s62
      %s84 = sphi 0, %s86
      %s87 = sphi 0, %s84
      %s88 = sphi 0, %s87
      %s104 = sphi 0, %s88
      %s112 = sphi 0, %s114
      %s115 = sphi 0, %s112
      %s116 = sphi 0, %s115
      %s132 = sphi 0, %s116
      %s140 = sphi 0, %s142
      %s143 = sphi 0, %s140
      %s144 = sphi 0, %s143
      %s160 = sphi 0, %s144
    $region4: #{_mresconv_impl.2} parent=1 // loop_header_branch
      %14 = sbr.rel (%p12) target = $region8
    $region5: #{_mresconv_impl.2} parent=1 // loop_body
      %s16 = ssub.s32 %s11, 1
      %s17 = ssub.s32 %s11, 2
      %s24 = sadd.s32 1, %s19
      %p25 = scmp.ge.s32.totalorder %s24, 4
      %s26 = scalar_select %p25, 0, %s24
      %s27 = sadd.s32 1, %s18
      %s28 = scalar_select %p25, %s27, %s18
      %p29 = scmp.ge.s32.totalorder %s28, 2
      %s30 = scalar_select %p29, 0, %s28
      %s31 = ssub.s32 %s18, %s30
      %s32 = ssub.s32 %s19, %s26
      %s33 = sor.u32 %s31, %s32
      %p34 = scmp.eq.s32.totalorder %s33, 0
      %s36 = sadd.s32 %s35, 1
      %s37 = scalar_select %p34, %s35, %s36
      %p40 = pneg %p34
      %p41 = scmp.eq.s32.totalorder %s11, 7
      %p42 = por %p40, %p41
      %p43 = scmp.ne.s32.totalorder %s35, %s38
      %p44 = scmp.eq.s32.totalorder %s11, 0
      %p45 = por %p43, %p44
      %p46 = scmp.ne.s32.totalorder %s35, %s38
      %p47 = scmp.eq.s32.totalorder %s16, 7
      %p48 = por %p46, %p47
      %p49 = scmp.ne.s32.totalorder %s38, %s39
      %p50 = scmp.eq.s32.totalorder %s16, 0
      %p51 = por %p49, %p50
      %p52 = scmp.ne.s32.totalorder %s38, %s39
      %p53 = scmp.eq.s32.totalorder %s17, 7
      %p54 = por %p52, %p53
      %p56 = scmp.ne.s32.totalorder %s39, %s55
      %p57 = scmp.eq.s32.totalorder %s17, 0
      %p58 = por %p56, %p57
      %s60 = sadd.s32 %s59, 1
      %p63 = scmp.eq.s32.totalorder %s11, 7
      %p64 = scmp.ne.s32.totalorder %s59, %s61
      %p65 = scmp.eq.s32.totalorder %s11, 0
      %p66 = por %p64, %p65
      %p67 = scmp.ne.s32.totalorder %s59, %s61
      %p68 = scmp.eq.s32.totalorder %s16, 7
      %p69 = por %p67, %p68
      %p70 = scmp.ne.s32.totalorder %s61, %s62
      %p71 = scmp.eq.s32.totalorder %s16, 0
      %p72 = por %p70, %p71
      %p73 = scmp.ne.s32.totalorder %s61, %s62
      %p74 = scmp.eq.s32.totalorder %s17, 7
      %p75 = por %p73, %p74
      %p77 = scmp.ne.s32.totalorder %s62, %s76
      %p78 = scmp.eq.s32.totalorder %s17, 0
      %p79 = por %p77, %p78
      %s80 = ssub.s32 %s18, %s30
      %s81 = ssub.s32 %s19, %s26
      %s82 = sor.u32 %s80, %s81
      %p83 = scmp.eq.s32.totalorder %s82, 0
      %s85 = sadd.s32 %s84, 1
      %s86 = scalar_select %p83, %s84, %s85
      %p89 = pneg %p83
      %p90 = scmp.eq.s32.totalorder %s11, 7
      %p91 = por %p89, %p90
      %p92 = scmp.ne.s32.totalorder %s84, %s87
      %p93 = scmp.eq.s32.totalorder %s11, 0
      %p94 = por %p92, %p93
      %p95 = scmp.ne.s32.totalorder %s84, %s87
      %p96 = scmp.eq.s32.totalorder %s16, 7
      %p97 = por %p95, %p96
      %p98 = scmp.ne.s32.totalorder %s87, %s88
      %p99 = scmp.eq.s32.totalorder %s16, 0
      %p100 = por %p98, %p99
      %p101 = scmp.ne.s32.totalorder %s87, %s88
      %p102 = scmp.eq.s32.totalorder %s17, 7
      %p103 = por %p101, %p102
      %p105 = scmp.ne.s32.totalorder %s88, %s104
      %p106 = scmp.eq.s32.totalorder %s17, 0
      %p107 = por %p105, %p106
      %s108 = ssub.s32 %s18, %s30
      %s109 = ssub.s32 %s19, %s26
      %s110 = sor.u32 %s108, %s109
      %p111 = scmp.eq.s32.totalorder %s110, 0
      %s113 = sadd.s32 %s112, 1
      %s114 = scalar_select %p111, %s112, %s113
      %p117 = pneg %p111
      %p118 = scmp.eq.s32.totalorder %s11, 7
      %p119 = por %p117, %p118
      %p120 = scmp.ne.s32.totalorder %s112, %s115
      %p121 = scmp.eq.s32.totalorder %s11, 0
      %p122 = por %p120, %p121
      %p123 = scmp.ne.s32.totalorder %s112, %s115
      %p124 = scmp.eq.s32.totalorder %s16, 7
      %p125 = por %p123, %p124
      %p126 = scmp.ne.s32.totalorder %s115, %s116
      %p127 = scmp.eq.s32.totalorder %s16, 0
      %p128 = por %p126, %p127
      %p129 = scmp.ne.s32.totalorder %s115, %s116
      %p130 = scmp.eq.s32.totalorder %s17, 7
      %p131 = por %p129, %p130
      %p133 = scmp.ne.s32.totalorder %s116, %s132
      %p134 = scmp.eq.s32.totalorder %s17, 0
      %p135 = por %p133, %p134
      %s136 = ssub.s32 %s18, %s30
      %s137 = ssub.s32 %s19, %s26
      %s138 = sor.u32 %s136, %s137
      %p139 = scmp.eq.s32.totalorder %s138, 0
      %s141 = sadd.s32 %s140, 1
      %s142 = scalar_select %p139, %s140, %s141
      %p145 = pneg %p139
      %p146 = scmp.eq.s32.totalorder %s11, 7
      %p147 = por %p145, %p146
      %p148 = scmp.ne.s32.totalorder %s140, %s143
      %p149 = scmp.eq.s32.totalorder %s11, 0
      %p150 = por %p148, %p149
      %p151 = scmp.ne.s32.totalorder %s140, %s143
      %p152 = scmp.eq.s32.totalorder %s16, 7
      %p153 = por %p151, %p152
      %p154 = scmp.ne.s32.totalorder %s143, %s144
      %p155 = scmp.eq.s32.totalorder %s16, 0
      %p156 = por %p154, %p155
      %p157 = scmp.ne.s32.totalorder %s143, %s144
      %p158 = scmp.eq.s32.totalorder %s17, 7
      %p159 = por %p157, %p158
      %p161 = scmp.ne.s32.totalorder %s144, %s160
      %p162 = scmp.eq.s32.totalorder %s17, 0
      %p163 = por %p161, %p162
      %p164 = scmp.le.s32.totalorder 1, %s11
      %p165 = scmp.lt.s32.totalorder %s11, 9
      %p166 = pnand %p164, %p165
      %p167 = pneg %p166
      // Predicated region
      $region9: #{_mresconv_impl.2} parent=5 // pred_check
        _
      $region10: #{_mresconv_impl.2} parent=5 // pred_check_branch
        %169 = sbr.rel (%p166) target = $region12
      $region11: #{_mresconv_impl.2} parent=5 // pred_region
        %s170 = ssub.s32 %s11, 1
        // Predicated region
        $region13: #{_mresconv_impl.2} parent=11 // pred_check
          %p171 = pneg %p72
        $region14: #{_mresconv_impl.2} parent=11 // pred_check_branch
          %173 = sbr.rel (%p171) target = $region16
        $region15: #{_mresconv_impl.2} parent=11 // pred_region
          _
        $region16: #{_mresconv_impl.2} parent=11 // pred_fallthru
          _
      $region12: #{_mresconv_impl.2} parent=5 // pred_fallthru
        _
      %p174 = scmp.lt.s32.totalorder %s11, 8
      // Predicated region
      $region17: #{_mresconv_impl.2} parent=5 // pred_check
        %p175 = pneg %p174
      $region18: #{_mresconv_impl.2} parent=5 // pred_check_branch
        %177 = sbr.rel (%p175) target = $region20
      $region19: #{_mresconv_impl.2} parent=5 // pred_region
        // Predicated region
        $region21: #{_mresconv_impl.2} parent=19 // pred_check
          %p178 = pneg %p45
        $region22: #{_mresconv_impl.2} parent=19 // pred_check_branch
          %180 = sbr.rel (%p178) target = $region24
        $region23: #{_mresconv_impl.2} parent=19 // pred_region
          %s181 = sand.u32 %s35, 1
          %s182 = sand.u32 %s35, 1
          %s183 = smul.addr %s182, 20
          %s184 = scalar_lea.vmem [#allocation3], %s183
          %s185 = smul.u32 2, %s19
          %s186 = smul.addr %s18, 40
          %s187 = sadd.s32 %s185, %s186
          %s188 = smul.addr %s187, 2
          %s189 = scalar_lea.vmem %s0, %s188
          // Predicated region
          $region25: #{_mresconv_impl.2} parent=23 // pred_check
            _
          $region26: #{_mresconv_impl.2} parent=23 // pred_check_branch
            %191 = sbr.rel (0) target = $region28
          $region27: #{_mresconv_impl.2} parent=23 // pred_region
            // Predicated region
            $region29: #{_mresconv_impl.2} parent=27 // pred_check
              _
            $region30: #{_mresconv_impl.2} parent=27 // pred_check_branch
              %193 = sbr.rel target = $region32
            $region31: #{_mresconv_impl.2} parent=27 // pred_region
              // Predicated region
              $region44: #{_mresconv_impl.2} parent=31 // pred_check
                _
              $region45: #{_mresconv_impl.2} parent=31 // pred_check_branch
                %216 = sbr.rel (0) target = $region47
              $region46: #{_mresconv_impl.2} parent=31 // pred_region
                loop: start=0, step=1, limit=1
                $region48: #{_mresconv_impl.2} parent=46 // loop_pre_header
                  _
                $region49: #{_mresconv_impl.2} parent=46 // loop_header
                  %s218 = sphi 0, %s222
                  %p219 = scmp.ge.s32.totalorder %s218, 1
                  %s223 = sphi %s189, %s189
                  %s224 = sphi %s184, %s184
                $region50: #{_mresconv_impl.2} parent=46 // loop_header_branch
                  %221 = sbr.rel (%p219) target = $region54
                $region51: #{_mresconv_impl.2} parent=46 // loop_body
                  _
                $region52: #{_mresconv_impl.2} parent=46 // loop_footer
                  %s222 = sadd.s32 1, %s218
                $region53: #{_mresconv_impl.2} parent=46 // loop_footer_branch
                  %217 = sbr.rel target = $region49
                $region54: #{_mresconv_impl.2} parent=46 // loop_exit
                  _
                loop: start=0, step=1, limit=1
                $region55: #{_mresconv_impl.2} parent=46 // loop_pre_header
                  _
                $region56: #{_mresconv_impl.2} parent=46 // loop_header
                  %s227 = sphi 0, %s231
                  %p228 = scmp.ge.s32.totalorder %s227, 1
                  %s232 = sphi %s189, %s189
                  %s233 = sphi %s184, %s184
                $region57: #{_mresconv_impl.2} parent=46 // loop_header_branch
                  %230 = sbr.rel (%p228) target = $region61
                $region58: #{_mresconv_impl.2} parent=46 // loop_body
                  %v234 = vld [vmem:[%s232] sm:$0xf]
                  %235 = vst [vmem:[%s233] sm:$0xf] %v234
                  %v236 = vld [vmem:[%s232 + $0x10] sm:$0xf]
                  %237 = vst [vmem:[%s233 + $0x4] sm:$0xf] %v236
                  %v238 = vld [vmem:[%s232 + $0x20] sm:$0xf]
                  %239 = vst [vmem:[%s233 + $0x8] sm:$0xf] %v238
                  %v240 = vld [vmem:[%s232 + $0x30] sm:$0xf]
                  %241 = vst [vmem:[%s233 + $0xc] sm:$0xf] %v240
                  %v242 = vld [vmem:[%s232 + $0x40] sm:$0xf]
                  %243 = vst [vmem:[%s233 + $0x10] sm:$0xf] %v242
                $region59: #{_mresconv_impl.2} parent=46 // loop_footer
                  %s231 = sadd.s32 1, %s227
                $region60: #{_mresconv_impl.2} parent=46 // loop_footer_branch
                  %226 = sbr.rel target = $region56
                $region61: #{_mresconv_impl.2} parent=46 // loop_exit
                  _
              $region47: #{_mresconv_impl.2} parent=31 // pred_fallthru
                _
            $region32: #{_mresconv_impl.2} parent=27 // pred_fallthru
              _
            // Predicated region
            $region33: #{_mresconv_impl.2} parent=27 // pred_check
              _
            $region34: #{_mresconv_impl.2} parent=27 // pred_check_branch
              %195 = sbr.rel (0) target = $region36
            $region35: #{_mresconv_impl.2} parent=27 // pred_region
              loop: start=0, step=1, limit=1
              $region37: #{_mresconv_impl.2} parent=35 // loop_pre_header
                _
              $region38: #{_mresconv_impl.2} parent=35 // loop_header
                %s198 = sphi 0, %s202
                %p199 = scmp.ge.s32.totalorder %s198, 1
                %s203 = sphi %s189, %s189
                %s204 = sphi %s184, %s184
              $region39: #{_mresconv_impl.2} parent=35 // loop_header_branch
                %201 = sbr.rel (%p199) target = $region43
              $region40: #{_mresconv_impl.2} parent=35 // loop_body
                %v205 = vld [vmem:[%s203] sm:$0xf]
                %206 = vst [vmem:[%s204] sm:$0xf] %v205
                %v207 = vld [vmem:[%s203 + $0x10] sm:$0xf]
                %208 = vst [vmem:[%s204 + $0x4] sm:$0xf] %v207
                %v209 = vld [vmem:[%s203 + $0x20] sm:$0xf]
                %210 = vst [vmem:[%s204 + $0x8] sm:$0xf] %v209
                %v211 = vld [vmem:[%s203 + $0x30] sm:$0xf]
                %212 = vst [vmem:[%s204 + $0xc] sm:$0xf] %v211
                %v213 = vld [vmem:[%s203 + $0x40] sm:$0xf]
                %214 = vst [vmem:[%s204 + $0x10] sm:$0xf] %v213
              $region41: #{_mresconv_impl.2} parent=35 // loop_footer
                %s202 = sadd.s32 1, %s198
              $region42: #{_mresconv_impl.2} parent=35 // loop_footer_branch
                %197 = sbr.rel target = $region38
              $region43: #{_mresconv_impl.2} parent=35 // loop_exit
                _
            $region36: #{_mresconv_impl.2} parent=27 // pred_fallthru
              _
          $region28: #{_mresconv_impl.2} parent=23 // pred_fallthru
            _
          %244 = vnop
        $region24: #{_mresconv_impl.2} parent=19 // pred_fallthru
          _
      $region20: #{_mresconv_impl.2} parent=5 // pred_fallthru
        _
      %p245 = scmp.le.s32.totalorder 1, %s11
      %p246 = scmp.lt.s32.totalorder %s11, 9
      %p247 = pnand %p245, %p246
      %p248 = pneg %p247
      // Predicated region
      $region62: #{_mresconv_impl.2} parent=5 // pred_check
        _
      $region63: #{_mresconv_impl.2} parent=5 // pred_check_branch
        %250 = sbr.rel (%p247) target = $region65
      $region64: #{_mresconv_impl.2} parent=5 // pred_region
        %s251 = ssub.s32 %s11, 1
        %s252 = sand.u32 %s38, 1
        %s253 = sand.u32 %s38, 1
        %s254 = smul.addr %s253, 20
        %s255 = scalar_lea.vmem [#allocation3], %s254
        // Predicated region
        $region66: #{_mresconv_impl.2} parent=64 // pred_check
          %p256 = pneg %p51
        $region67: #{_mresconv_impl.2} parent=64 // pred_check_branch
          %258 = sbr.rel (%p256) target = $region69
        $region68: #{_mresconv_impl.2} parent=64 // pred_region
          _
        $region69: #{_mresconv_impl.2} parent=64 // pred_fallthru
          _
        %s259 = sand.u32 %s38, 1
        %s260 = sand.u32 %s38, 1
        %s261 = smul.addr %s260, 20
        %s262 = scalar_lea.vmem [#allocation3], %s261
        %p263 = pneg %p51
        %p264 = pneg %p48
        %p265 = pneg %p72
        %p266 = pneg %p69
        %p267 = pneg %p100
        %p268 = pneg %p97
        %s269 = smul.u32 2, %s21
        %p270 = scmp.lt.s32.totalorder %s20, 1
        %s271 = scalar_select %p270, %s20, 1
        %p272 = scmp.lt.s32.totalorder %s269, 7
        %s273 = scalar_select %p272, %s269, 7
        %s274 = smul.addr %s271, 8
        %s275 = sadd.s32 %s273, %s274
        %s276 = smul.addr %s275, 4
        %s277 = scalar_lea.vmem %s2, %s276
        %p278 = pneg %p128
        %p279 = pneg %p125
        %p280 = scmp.lt.s32.totalorder %s20, 1
        %s281 = scalar_select %p280, %s20, 1
        %p282 = scmp.lt.s32.totalorder %s21, 3
        %s283 = scalar_select %p282, %s21, 3
        %s284 = smul.addr %s281, 4
        %s285 = sadd.s32 %s283, %s284
        %s286 = smul.addr %s285, 8
        %s287 = scalar_lea.vmem %s3, %s286
        %p288 = pneg %p156
        %p289 = pneg %p153
        %p290 = scmp.lt.s32.totalorder %s20, 1
        %s291 = scalar_select %p290, %s20, 1
        %p292 = scmp.lt.s32.totalorder %s21, 3
        %s293 = scalar_select %p292, %s21, 3
        %s294 = smul.addr %s291, 4
        %s295 = sadd.s32 %s293, %s294
        %s296 = smul.addr %s295, 8
        %s297 = scalar_lea.vmem %s4, %s296
        %s298 = smul.u32 2, %s21
        %s299 = smul.u32 2, %s21
        %p300 = scmp.lt.s32.totalorder %s20, 1
        %s301 = scalar_select %p300, %s20, 1
        %p302 = scmp.lt.s32.totalorder %s299, 7
        %s303 = scalar_select %p302, %s299, 7
        %s304 = smul.addr %s301, 8
        %s305 = sadd.s32 %s303, %s304
        %s306 = smul.addr %s305, 4
        %s307 = scalar_lea.vmem %s2, %s306
        %s308 = smul.u32 2, %s21
        %p309 = scmp.lt.s32.totalorder %s20, 1
        %s310 = scalar_select %p309, %s20, 1
        %p311 = scmp.lt.s32.totalorder %s21, 3
        %s312 = scalar_select %p311, %s21, 3
        %s313 = smul.addr %s310, 4
        %s314 = sadd.s32 %s312, %s313
        %s315 = smul.addr %s314, 8
        %s316 = scalar_lea.vmem %s3, %s315
        %p317 = scmp.lt.s32.totalorder %s20, 1
        %s318 = scalar_select %p317, %s20, 1
        %p319 = scmp.lt.s32.totalorder %s21, 3
        %s320 = scalar_select %p319, %s21, 3
        %s321 = smul.addr %s318, 4
        %s322 = sadd.s32 %s320, %s321
        %s323 = smul.addr %s322, 8
        %s324 = scalar_lea.vmem %s4, %s323
        %v326 = vld [vmem:[%s255] sm:$0xf]
        %v329 = vunpack.c.l.s4 1983009808
        %v330 = vunpack.c.0.s8 %v329
        %v331 = vlaneseq
        %v332 = vshrl.u32 %v331, 7
        %v333 = vsub.s32 %v330, %v332
        %v334 = vrot.slane %v326, %v333
        %v335 = vcombine.high %v334, %v334
        %vm336 = vcmask 1041408
        %v339 = vsel %vm336, %v334, 0
        %v342 = vsel %vm336, %v335, 0
        %344 = vst [vmem:[#allocation2] sm:$0xff] %v339
        %345 = vst [vmem:[#allocation2 + $0x8] sm:$0xff] %v342
        %s346 = scalar_lea.vmem %s255, 4 [#allocation3]
        %v347 = vld [vmem:[%s346] sm:$0xf]
        %v348 = vunpack.c.l.bf16 %v347
        %s349 = scalar_lea.vmem %s255, 8 [#allocation3]
        %v350 = vld [vmem:[%s349] sm:$0xf]
        %v351 = vunpack.c.l.bf16 %v350
        %s352 = scalar_lea.vmem %s255, 12 [#allocation3]
        %v353 = vld [vmem:[%s352] sm:$0xf]
        %v354 = vunpack.c.l.bf16 %v353
        %s355 = scalar_lea.vmem %s255, 16 [#allocation3]
        %v356 = vld [vmem:[%s355] sm:$0xf]
        %v357 = vunpack.c.l.bf16 %v356
        %v358 = vsub.f32 %v348, %v354
        %v359 = vand.u32 2147483647, %v358
        %v361 = vcombine.high %v359, %v359
        %v363 = vpack.c.bf16 %v359, %v359
        %v364 = vpack.c.bf16 %v361, %v361
        %v366 = vsel %vm336, %v363, 0
        %v369 = vsel %vm336, %v364, 0
        %371 = vst [vmem:[#allocation2 + $0x30] sm:$0xff] %v366
        %372 = vst [vmem:[#allocation2 + $0x38] sm:$0xff] %v369
        %v373 = vsub.f32 %v351, %v357
        %v374 = vand.u32 2147483647, %v373
        %v376 = vcombine.high %v374, %v374
        %v378 = vpack.c.bf16 %v374, %v374
        %v379 = vpack.c.bf16 %v376, %v376
        %v381 = vsel %vm336, %v378, 0
        %v384 = vsel %vm336, %v379, 0
        %386 = vst [vmem:[#allocation2 + $0x40] sm:$0xff] %v381
        %387 = vst [vmem:[#allocation2 + $0x48] sm:$0xff] %v384
        %v388 = vadd.f32 %v348, %v354
        %v389 = vadd.f32 %v351, %v357
        %v391 = vcombine.high %v388, %v388
        %v393 = vpack.c.bf16 %v388, %v388
        %v394 = vpack.c.bf16 %v391, %v391
        %v396 = vsel %vm336, %v393, 0
        %v399 = vsel %vm336, %v394, 0
        %401 = vst [vmem:[#allocation2 + $0x10] sm:$0xff] %v396
        %402 = vst [vmem:[#allocation2 + $0x18] sm:$0xff] %v399
        %v404 = vcombine.high %v389, %v389
        %v406 = vpack.c.bf16 %v389, %v389
        %v407 = vpack.c.bf16 %v404, %v404
        %v409 = vsel %vm336, %v406, 0
        %v412 = vsel %vm336, %v407, 0
        %414 = vst [vmem:[#allocation2 + $0x20] sm:$0xff] %v409
        %415 = vst [vmem:[#allocation2 + $0x28] sm:$0xff] %v412
        %v416 = vadd.f32 %v388, %v389
        %v418 = vcombine.high %v416, %v416
        %v420 = vpack.c.bf16 %v416, %v416
        %v421 = vpack.c.bf16 %v418, %v418
        %v423 = vsel %vm336, %v420, 0
        %v426 = vsel %vm336, %v421, 0
        %428 = vst [vmem:[#allocation2 + $0x50] sm:$0xff] %v423
        %429 = vst [vmem:[#allocation2 + $0x58] sm:$0xff] %v426
        %v430 = vmul.f32 %v416, 0.25
        %v431 = vsub.f32 %v348, %v430
        %v432 = vsub.f32 %v351, %v430
        %v433 = vsub.f32 %v354, %v430
        %v434 = vsub.f32 %v357, %v430
        %v435 = vmul.f32 %v431, %v431
        %v436 = vmul.f32 %v432, %v432
        %v437 = vadd.f32 %v435, %v436
        %v438 = vmul.f32 %v433, %v433
        %v439 = vadd.f32 %v437, %v438
        %v440 = vmul.f32 %v434, %v434
        %v441 = vadd.f32 %v439, %v440
        %v443 = vcombine.high %v441, %v441
        %v445 = vpack.c.bf16 %v441, %v441
        %v446 = vpack.c.bf16 %v443, %v443
        %v448 = vsel %vm336, %v445, 0
        %v451 = vsel %vm336, %v446, 0
        %453 = vst [vmem:[#allocation2 + $0x60] sm:$0xff] %v448
        %454 = vst [vmem:[#allocation2 + $0x68] sm:$0xff] %v451
        %v455 = vld [vmem:[%s1] sm:$0xf]
        %v456 = vld [vmem:[#allocation2] sm:$0xff]
        %v457 = vld [vmem:[#allocation2 + $0x8] sm:$0xff]
        %v458 = vld [vmem:[#allocation2 + $0x10] sm:$0xff]
        %v459 = vld [vmem:[#allocation2 + $0x18] sm:$0xff]
        %v460 = vld [vmem:[#allocation2 + $0x20] sm:$0xff]
        %v461 = vld [vmem:[#allocation2 + $0x28] sm:$0xff]
        %v462 = vld [vmem:[#allocation2 + $0x30] sm:$0xff]
        %v463 = vld [vmem:[#allocation2 + $0x38] sm:$0xff]
        %v464 = vld [vmem:[#allocation2 + $0x40] sm:$0xff]
        %v465 = vld [vmem:[#allocation2 + $0x48] sm:$0xff]
        %v466 = vld [vmem:[#allocation2 + $0x50] sm:$0xff]
        %v467 = vld [vmem:[#allocation2 + $0x58] sm:$0xff]
        %v468 = vld [vmem:[#allocation2 + $0x60] sm:$0xff]
        %v469 = vld [vmem:[#allocation2 + $0x68] sm:$0xff]
        %vm470 = vcmask 916480
        %v472 = vsel %vm470, %v455, 0
        %474 = vmatprep.subr.bf16.mxu0 %v457
        %475 = vmatpush1.bf16.msra.mxu0 %v456
        %476 = vmatprep.subr.bf16.mxu0 %v459
        %477 = vmatpush1.bf16.msra.mxu0 %v458
        %478 = vmatprep.subr.bf16.mxu0 %v461
        %479 = vmatpush1.bf16.msra.mxu0 %v460
        %480 = vmatprep.subr.bf16.mxu0 %v463
        %481 = vmatpush1.bf16.msra.mxu0 %v462
        %482 = vmatprep.subr.bf16.mxu0 %v465
        %483 = vmatpush1.bf16.msra.mxu0 %v464
        %484 = vmatprep.subr.bf16.mxu0 %v467
        %485 = vmatpush1.bf16.msra.mxu0 %v466
        %486 = vmatprep.subr.bf16.mxu0 %v469
        %487 = vmatpush1.bf16.msra.mxu0 %v468
        %488 = vmatprep.subr.bf16.mxu0 0
        %489 = vmatpush1.bf16.msra.mxu0 0
        %490 = vmatprep.subr.bf16.mxu0 0
        %491 = vmatpush1.bf16.msra.mxu0 0
        %492 = vmatprep.subr.bf16.mxu0 0
        %493 = vmatpush1.bf16.msra.mxu0 0
        %494 = vmatprep.subr.bf16.mxu0 0
        %495 = vmatpush1.bf16.msra.mxu0 0
        %496 = vmatprep.subr.bf16.mxu0 0
        %497 = vmatpush1.bf16.msra.mxu0 0
        %498 = vmatprep.subr.bf16.mxu0 0
        %499 = vmatpush1.bf16.msra.mxu0 0
        %500 = vmatprep.subr.bf16.mxu0 0
        %501 = vmatpush1.bf16.msra.mxu0 0
        %502 = vmatprep.subr.bf16.mxu0 0
        %503 = vmatpush1.bf16.msra.mxu0 0
        %504 = vmatprep.subr.bf16.mxu0 0
        %505 = vmatpush1.bf16.msra.mxu0 0
        %506 = vmatprep.mubr.bf16.mxu0 0
        %507 = vmatmul.mubr.bf16.gmra.mrb[0].mxu0 %v472
        %v508 = vpop.f32.mrb[0].mxu0
        %v509 = vadd.f32 0.0, %v508
        %v510 = vpop.f32.mrb[0].mxu0
        %v511 = vadd.f32 0.0, %v510
        %v512 = vpop.f32.mrb[0].mxu0
        %v513 = vpop.f32.mrb[0].mxu0
        %514 = vdwg.mxu0
        %v515 = vpack.c.bf16 %v509, %v509
        %v516 = vpack.c.bf16 %v511, %v511
        %v519 = vunpack.c.l.b16 %v515
        %v520 = vunpack.c.l.b16 %v516
        %v521 = vpack.c.b16 %v520, %v519
        %523 = vst [vmem:[%s307] sm:$0xff] %v521
        %vm524 = vcmp.ge.f32.partialorder %v509, 0.0
        %vm525 = vcmp.ge.f32.partialorder %v511, 0.0
        %v526 = vmul.f32 %v509, 0.01
        %v527 = vmul.f32 %v511, 0.01
        %v528 = vsel %vm524, %v509, %v526
        %v529 = vsel %vm525, %v511, %v527
        %v530 = vadd.f32 %v528, %v529
        %531 = vadd.xlane.f32.xlu0 %v530
        %v532 = vpop.xlane.xlu0 %531
        %vm533 = vcmask 7168
        %534 = vst.msk [vmem:[%s316] sm:$0xff] %vm533, %v532
        %v535 = vmul.f32 %v528, %v528
        %v536 = vmul.f32 %v529, %v529
        %v537 = vadd.f32 %v535, %v536
        %538 = vadd.xlane.f32.xlu0 %v537
        %v539 = vpop.xlane.xlu0 %538
        %540 = vst.msk [vmem:[%s324] sm:$0xff] %vm533, %v539
        %s541 = smul.u32 2, %s21
        %p542 = scmp.lt.s32.totalorder %s20, 1
        %s543 = scalar_select %p542, %s20, 1
        %p544 = scmp.lt.s32.totalorder %s541, 7
        %s545 = scalar_select %p544, %s541, 7
        %s546 = smul.addr %s543, 8
        %s547 = sadd.s32 %s545, %s546
        %s548 = smul.addr %s547, 4
        %s549 = scalar_lea.vmem %s2, %s548
        %p550 = scmp.lt.s32.totalorder %s20, 1
        %s551 = scalar_select %p550, %s20, 1
        %p552 = scmp.lt.s32.totalorder %s21, 3
        %s553 = scalar_select %p552, %s21, 3
        %s554 = smul.addr %s551, 4
        %s555 = sadd.s32 %s553, %s554
        %s556 = smul.addr %s555, 8
        %s557 = scalar_lea.vmem %s3, %s556
        %p558 = scmp.lt.s32.totalorder %s20, 1
        %s559 = scalar_select %p558, %s20, 1
        %p560 = scmp.lt.s32.totalorder %s21, 3
        %s561 = scalar_select %p560, %s21, 3
        %s562 = smul.addr %s559, 4
        %s563 = sadd.s32 %s561, %s562
        %s564 = smul.addr %s563, 8
        %s565 = scalar_lea.vmem %s4, %s564
        // Predicated region
        $region70: #{_mresconv_impl.2} parent=64 // pred_check
          %p566 = pneg %p97
        $region71: #{_mresconv_impl.2} parent=64 // pred_check_branch
          %568 = sbr.rel (%p566) target = $region73
        $region72: #{_mresconv_impl.2} parent=64 // pred_region
          %s569 = smul.u32 2, %s21
        $region73: #{_mresconv_impl.2} parent=64 // pred_fallthru
          _
        // Predicated region
        $region74: #{_mresconv_impl.2} parent=64 // pred_check
          %p570 = pneg %p125
        $region75: #{_mresconv_impl.2} parent=64 // pred_check_branch
          %572 = sbr.rel (%p570) target = $region77
        $region76: #{_mresconv_impl.2} parent=64 // pred_region
          _
        $region77: #{_mresconv_impl.2} parent=64 // pred_fallthru
          _
        // Predicated region
        $region78: #{_mresconv_impl.2} parent=64 // pred_check
          %p573 = pneg %p153
        $region79: #{_mresconv_impl.2} parent=64 // pred_check_branch
          %575 = sbr.rel (%p573) target = $region81
        $region80: #{_mresconv_impl.2} parent=64 // pred_region
          _
        $region81: #{_mresconv_impl.2} parent=64 // pred_fallthru
          _
      $region65: #{_mresconv_impl.2} parent=5 // pred_fallthru
        _
      %p576 = scmp.le.s32.totalorder 2, %s11
      // Predicated region
      $region82: #{_mresconv_impl.2} parent=5 // pred_check
        %p577 = pneg %p576
      $region83: #{_mresconv_impl.2} parent=5 // pred_check_branch
        %579 = sbr.rel (%p577) target = $region85
      $region84: #{_mresconv_impl.2} parent=5 // pred_region
        %s580 = ssub.s32 %s11, 2
        // Predicated region
        $region86: #{_mresconv_impl.2} parent=84 // pred_check
          %p581 = pneg %p103
        $region87: #{_mresconv_impl.2} parent=84 // pred_check_branch
          %583 = sbr.rel (%p581) target = $region89
        $region88: #{_mresconv_impl.2} parent=84 // pred_region
          %s584 = smul.u32 2, %s23
          %p585 = scmp.lt.s32.totalorder %s22, 1
          %s586 = scalar_select %p585, %s22, 1
          %p587 = scmp.lt.s32.totalorder %s584, 7
          %s588 = scalar_select %p587, %s584, 7
          %s589 = smul.addr %s586, 8
          %s590 = sadd.s32 %s588, %s589
          %s591 = smul.addr %s590, 4
          %s592 = scalar_lea.vmem %s2, %s591
        $region89: #{_mresconv_impl.2} parent=84 // pred_fallthru
          _
        // Predicated region
        $region90: #{_mresconv_impl.2} parent=84 // pred_check
          %p593 = pneg %p131
        $region91: #{_mresconv_impl.2} parent=84 // pred_check_branch
          %595 = sbr.rel (%p593) target = $region93
        $region92: #{_mresconv_impl.2} parent=84 // pred_region
          %p596 = scmp.lt.s32.totalorder %s22, 1
          %s597 = scalar_select %p596, %s22, 1
          %p598 = scmp.lt.s32.totalorder %s23, 3
          %s599 = scalar_select %p598, %s23, 3
          %s600 = smul.addr %s597, 4
          %s601 = sadd.s32 %s599, %s600
          %s602 = smul.addr %s601, 8
          %s603 = scalar_lea.vmem %s3, %s602
        $region93: #{_mresconv_impl.2} parent=84 // pred_fallthru
          _
        // Predicated region
        $region94: #{_mresconv_impl.2} parent=84 // pred_check
          %p604 = pneg %p159
        $region95: #{_mresconv_impl.2} parent=84 // pred_check_branch
          %606 = sbr.rel (%p604) target = $region97
        $region96: #{_mresconv_impl.2} parent=84 // pred_region
          %p607 = scmp.lt.s32.totalorder %s22, 1
          %s608 = scalar_select %p607, %s22, 1
          %p609 = scmp.lt.s32.totalorder %s23, 3
          %s610 = scalar_select %p609, %s23, 3
          %s611 = smul.addr %s608, 4
          %s612 = sadd.s32 %s610, %s611
          %s613 = smul.addr %s612, 8
          %s614 = scalar_lea.vmem %s4, %s613
        $region97: #{_mresconv_impl.2} parent=84 // pred_fallthru
          _
      $region85: #{_mresconv_impl.2} parent=5 // pred_fallthru
        _
    $region6: #{_mresconv_impl.2} parent=1 // loop_footer
      %s15 = sadd.s32 1, %s11
    $region7: #{_mresconv_impl.2} parent=1 // loop_footer_branch
      %10 = sbr.rel target = $region3
    $region8: #{_mresconv_impl.2} parent=1 // loop_exit
      _

// kernel: _mresconv_impl.3
$region0: #{_mresconv_impl.3}
  #allocation0 [shape = 'u32[]', space=smem, size = 0x4, offset = 0x4, fixed_abs, tag = 'smem constant byte address 0x4 - core index']
  #allocation1 [shape = 'u32[144,128]{1,0:T(1,128)}', space=vmem, size = 0x12000, scoped, tag = 'internal scratch']
  #allocation2 [shape = 'bf16[112,256]{1,0:T(16,128)(2,1)}', space=vmem, size = 0xe000, scoped, tag = 'scratch operand']
  %s0 = inlined_call_operand.vmem [shape: bf16[2,5,8,1024], index: 0, kind: input, shape index: {}]
  %s1 = inlined_call_operand.vmem [shape: bf16[8,112], index: 1, kind: input, shape index: {}]
  %s2 = inlined_call_operand.vmem [shape: bf16[2,8,1024], index: 2, kind: input, shape index: {}]
  %s3 = inlined_call_operand.vmem [shape: f32[2,8,1024], index: 3, kind: output, shape index: {}]
  %s4 = sld [smem:[#allocation0]]
  $region83: #{_mresconv_impl.3} parent=0
    _
  %s6 = ssub.s32 1, %s4
  %s7 = scalar_select 0, %s6, %s4
  $region1: #{_mresconv_impl.3} parent=0
    #allocation3 [shape = 'u8[40960]{0}', space=vmem, size = 0xa000, scoped, tag = 'input window, operand 0']
    loop: start=0, step=1, limit=10
    $region2: #{_mresconv_impl.3} parent=1 // loop_pre_header
      _
    $region3: #{_mresconv_impl.3} parent=1 // loop_header
      %s9 = sphi 0, %s13
      %p10 = scmp.ge.s32.totalorder %s9, 10
      %s16 = sphi 0, %s28
      %s17 = sphi 0, %s24
      %s18 = sphi 0, %s16
      %s19 = sphi 0, %s17
      %s20 = sphi 0, %s18
      %s21 = sphi 0, %s19
      %s33 = sphi 0, %s35
      %s36 = sphi 0, %s33
      %s37 = sphi 0, %s36
      %s53 = sphi 0, %s37
      %s57 = sphi 0, %s57
      %s59 = sphi 0, %s57
      %s60 = sphi 0, %s59
      %s74 = sphi 0, %s60
      %s82 = sphi 0, %s84
      %s85 = sphi 0, %s82
      %s86 = sphi 0, %s85
      %s102 = sphi 0, %s86
      %s110 = sphi 0, %s112
      %s113 = sphi 0, %s110
      %s114 = sphi 0, %s113
      %s130 = sphi 0, %s114
    $region4: #{_mresconv_impl.3} parent=1 // loop_header_branch
      %12 = sbr.rel (%p10) target = $region8
    $region5: #{_mresconv_impl.3} parent=1 // loop_body
      %s14 = ssub.s32 %s9, 1
      %s15 = ssub.s32 %s9, 2
      %s22 = sadd.s32 1, %s17
      %p23 = scmp.ge.s32.totalorder %s22, 4
      %s24 = scalar_select %p23, 0, %s22
      %s25 = sadd.s32 1, %s16
      %s26 = scalar_select %p23, %s25, %s16
      %p27 = scmp.ge.s32.totalorder %s26, 2
      %s28 = scalar_select %p27, 0, %s26
      %s29 = ssub.s32 %s16, %s28
      %s30 = ssub.s32 %s17, %s24
      %s31 = sor.u32 %s29, %s30
      %p32 = scmp.eq.s32.totalorder %s31, 0
      %s34 = sadd.s32 %s33, 1
      %s35 = scalar_select %p32, %s33, %s34
      %p38 = pneg %p32
      %p39 = scmp.eq.s32.totalorder %s9, 7
      %p40 = por %p38, %p39
      %p41 = scmp.ne.s32.totalorder %s33, %s36
      %p42 = scmp.eq.s32.totalorder %s9, 0
      %p43 = por %p41, %p42
      %p44 = scmp.ne.s32.totalorder %s33, %s36
      %p45 = scmp.eq.s32.totalorder %s14, 7
      %p46 = por %p44, %p45
      %p47 = scmp.ne.s32.totalorder %s36, %s37
      %p48 = scmp.eq.s32.totalorder %s14, 0
      %p49 = por %p47, %p48
      %p50 = scmp.ne.s32.totalorder %s36, %s37
      %p51 = scmp.eq.s32.totalorder %s15, 7
      %p52 = por %p50, %p51
      %p54 = scmp.ne.s32.totalorder %s37, %s53
      %p55 = scmp.eq.s32.totalorder %s15, 0
      %p56 = por %p54, %p55
      %s58 = sadd.s32 %s57, 1
      %p61 = scmp.eq.s32.totalorder %s9, 7
      %p62 = scmp.ne.s32.totalorder %s57, %s59
      %p63 = scmp.eq.s32.totalorder %s9, 0
      %p64 = por %p62, %p63
      %p65 = scmp.ne.s32.totalorder %s57, %s59
      %p66 = scmp.eq.s32.totalorder %s14, 7
      %p67 = por %p65, %p66
      %p68 = scmp.ne.s32.totalorder %s59, %s60
      %p69 = scmp.eq.s32.totalorder %s14, 0
      %p70 = por %p68, %p69
      %p71 = scmp.ne.s32.totalorder %s59, %s60
      %p72 = scmp.eq.s32.totalorder %s15, 7
      %p73 = por %p71, %p72
      %p75 = scmp.ne.s32.totalorder %s60, %s74
      %p76 = scmp.eq.s32.totalorder %s15, 0
      %p77 = por %p75, %p76
      %s78 = ssub.s32 %s16, %s28
      %s79 = ssub.s32 %s17, %s24
      %s80 = sor.u32 %s78, %s79
      %p81 = scmp.eq.s32.totalorder %s80, 0
      %s83 = sadd.s32 %s82, 1
      %s84 = scalar_select %p81, %s82, %s83
      %p87 = pneg %p81
      %p88 = scmp.eq.s32.totalorder %s9, 7
      %p89 = por %p87, %p88
      %p90 = scmp.ne.s32.totalorder %s82, %s85
      %p91 = scmp.eq.s32.totalorder %s9, 0
      %p92 = por %p90, %p91
      %p93 = scmp.ne.s32.totalorder %s82, %s85
      %p94 = scmp.eq.s32.totalorder %s14, 7
      %p95 = por %p93, %p94
      %p96 = scmp.ne.s32.totalorder %s85, %s86
      %p97 = scmp.eq.s32.totalorder %s14, 0
      %p98 = por %p96, %p97
      %p99 = scmp.ne.s32.totalorder %s85, %s86
      %p100 = scmp.eq.s32.totalorder %s15, 7
      %p101 = por %p99, %p100
      %p103 = scmp.ne.s32.totalorder %s86, %s102
      %p104 = scmp.eq.s32.totalorder %s15, 0
      %p105 = por %p103, %p104
      %s106 = ssub.s32 %s16, %s28
      %s107 = ssub.s32 %s17, %s24
      %s108 = sor.u32 %s106, %s107
      %p109 = scmp.eq.s32.totalorder %s108, 0
      %s111 = sadd.s32 %s110, 1
      %s112 = scalar_select %p109, %s110, %s111
      %p115 = pneg %p109
      %p116 = scmp.eq.s32.totalorder %s9, 7
      %p117 = por %p115, %p116
      %p118 = scmp.ne.s32.totalorder %s110, %s113
      %p119 = scmp.eq.s32.totalorder %s9, 0
      %p120 = por %p118, %p119
      %p121 = scmp.ne.s32.totalorder %s110, %s113
      %p122 = scmp.eq.s32.totalorder %s14, 7
      %p123 = por %p121, %p122
      %p124 = scmp.ne.s32.totalorder %s113, %s114
      %p125 = scmp.eq.s32.totalorder %s14, 0
      %p126 = por %p124, %p125
      %p127 = scmp.ne.s32.totalorder %s113, %s114
      %p128 = scmp.eq.s32.totalorder %s15, 7
      %p129 = por %p127, %p128
      %p131 = scmp.ne.s32.totalorder %s114, %s130
      %p132 = scmp.eq.s32.totalorder %s15, 0
      %p133 = por %p131, %p132
      %p134 = scmp.le.s32.totalorder 1, %s9
      %p135 = scmp.lt.s32.totalorder %s9, 9
      %p136 = pnand %p134, %p135
      %p137 = pneg %p136
      // Predicated region
      $region9: #{_mresconv_impl.3} parent=5 // pred_check
        _
      $region10: #{_mresconv_impl.3} parent=5 // pred_check_branch
        %139 = sbr.rel (%p136) target = $region12
      $region11: #{_mresconv_impl.3} parent=5 // pred_region
        %s140 = ssub.s32 %s9, 1
        // Predicated region
        $region13: #{_mresconv_impl.3} parent=11 // pred_check
          %p141 = pneg %p70
        $region14: #{_mresconv_impl.3} parent=11 // pred_check_branch
          %143 = sbr.rel (%p141) target = $region16
        $region15: #{_mresconv_impl.3} parent=11 // pred_region
          _
        $region16: #{_mresconv_impl.3} parent=11 // pred_fallthru
          _
      $region12: #{_mresconv_impl.3} parent=5 // pred_fallthru
        _
      %p144 = scmp.lt.s32.totalorder %s9, 8
      // Predicated region
      $region17: #{_mresconv_impl.3} parent=5 // pred_check
        %p145 = pneg %p144
      $region18: #{_mresconv_impl.3} parent=5 // pred_check_branch
        %147 = sbr.rel (%p145) target = $region20
      $region19: #{_mresconv_impl.3} parent=5 // pred_region
        // Predicated region
        $region21: #{_mresconv_impl.3} parent=19 // pred_check
          %p148 = pneg %p43
        $region22: #{_mresconv_impl.3} parent=19 // pred_check_branch
          %150 = sbr.rel (%p148) target = $region24
        $region23: #{_mresconv_impl.3} parent=19 // pred_region
          %s151 = sand.u32 %s33, 1
          %s152 = sand.u32 %s33, 1
          %s153 = smul.addr %s152, 40
          %s154 = scalar_lea.vmem [#allocation3], %s153
          %s155 = smul.u32 2, %s17
          %s156 = smul.addr %s16, 40
          %s157 = sadd.s32 %s155, %s156
          %s158 = smul.addr %s157, 4
          %s159 = scalar_lea.vmem %s0, %s158
          // Predicated region
          $region25: #{_mresconv_impl.3} parent=23 // pred_check
            _
          $region26: #{_mresconv_impl.3} parent=23 // pred_check_branch
            %161 = sbr.rel (0) target = $region28
          $region27: #{_mresconv_impl.3} parent=23 // pred_region
            // Predicated region
            $region29: #{_mresconv_impl.3} parent=27 // pred_check
              _
            $region30: #{_mresconv_impl.3} parent=27 // pred_check_branch
              %163 = sbr.rel (0) target = $region32
            $region31: #{_mresconv_impl.3} parent=27 // pred_region
              // Predicated region
              $region44: #{_mresconv_impl.3} parent=31 // pred_check
                _
              $region45: #{_mresconv_impl.3} parent=31 // pred_check_branch
                %186 = sbr.rel (0) target = $region47
              $region46: #{_mresconv_impl.3} parent=31 // pred_region
                loop: start=0, step=1, limit=1
                $region48: #{_mresconv_impl.3} parent=46 // loop_pre_header
                  _
                $region49: #{_mresconv_impl.3} parent=46 // loop_header
                  %s188 = sphi 0, %s192
                  %p189 = scmp.ge.s32.totalorder %s188, 1
                  %s193 = sphi %s159, %s159
                  %s194 = sphi %s154, %s154
                $region50: #{_mresconv_impl.3} parent=46 // loop_header_branch
                  %191 = sbr.rel (%p189) target = $region54
                $region51: #{_mresconv_impl.3} parent=46 // loop_body
                  %v195 = vld [vmem:[%s193] sm:$0xff]
                  %196 = vst [vmem:[%s194] sm:$0xff] %v195
                  %v197 = vld [vmem:[%s193 + $0x20] sm:$0xff]
                  %198 = vst [vmem:[%s194 + $0x8] sm:$0xff] %v197
                  %v199 = vld [vmem:[%s193 + $0x40] sm:$0xff]
                  %200 = vst [vmem:[%s194 + $0x10] sm:$0xff] %v199
                  %v201 = vld [vmem:[%s193 + $0x60] sm:$0xff]
                  %202 = vst [vmem:[%s194 + $0x18] sm:$0xff] %v201
                  %v203 = vld [vmem:[%s193 + $0x80] sm:$0xff]
                  %204 = vst [vmem:[%s194 + $0x20] sm:$0xff] %v203
                $region52: #{_mresconv_impl.3} parent=46 // loop_footer
                  %s192 = sadd.s32 1, %s188
                $region53: #{_mresconv_impl.3} parent=46 // loop_footer_branch
                  %187 = sbr.rel target = $region49
                $region54: #{_mresconv_impl.3} parent=46 // loop_exit
                  _
              $region47: #{_mresconv_impl.3} parent=31 // pred_fallthru
                _
              // Predicated region
              $region55: #{_mresconv_impl.3} parent=31 // pred_check
                _
              $region56: #{_mresconv_impl.3} parent=31 // pred_check_branch
                %206 = sbr.rel target = $region58
              $region57: #{_mresconv_impl.3} parent=31 // pred_region
                _
              $region58: #{_mresconv_impl.3} parent=31 // pred_fallthru
                _
            $region32: #{_mresconv_impl.3} parent=27 // pred_fallthru
              _
            // Predicated region
            $region33: #{_mresconv_impl.3} parent=27 // pred_check
              _
            $region34: #{_mresconv_impl.3} parent=27 // pred_check_branch
              %165 = sbr.rel target = $region36
            $region35: #{_mresconv_impl.3} parent=27 // pred_region
              loop: start=0, step=1, limit=1
              $region37: #{_mresconv_impl.3} parent=35 // loop_pre_header
                _
              $region38: #{_mresconv_impl.3} parent=35 // loop_header
                %s168 = sphi 0, %s172
                %p169 = scmp.ge.s32.totalorder %s168, 1
                %s173 = sphi %s159, %s159
                %s174 = sphi %s154, %s154
              $region39: #{_mresconv_impl.3} parent=35 // loop_header_branch
                %171 = sbr.rel (%p169) target = $region43
              $region40: #{_mresconv_impl.3} parent=35 // loop_body
                %v175 = vld [vmem:[%s173] sm:$0xff]
                %176 = vst [vmem:[%s174] sm:$0xff] %v175
                %v177 = vld [vmem:[%s173 + $0x20] sm:$0xff]
                %178 = vst [vmem:[%s174 + $0x8] sm:$0xff] %v177
                %v179 = vld [vmem:[%s173 + $0x40] sm:$0xff]
                %180 = vst [vmem:[%s174 + $0x10] sm:$0xff] %v179
                %v181 = vld [vmem:[%s173 + $0x60] sm:$0xff]
                %182 = vst [vmem:[%s174 + $0x18] sm:$0xff] %v181
                %v183 = vld [vmem:[%s173 + $0x80] sm:$0xff]
                %184 = vst [vmem:[%s174 + $0x20] sm:$0xff] %v183
              $region41: #{_mresconv_impl.3} parent=35 // loop_footer
                %s172 = sadd.s32 1, %s168
              $region42: #{_mresconv_impl.3} parent=35 // loop_footer_branch
                %167 = sbr.rel target = $region38
              $region43: #{_mresconv_impl.3} parent=35 // loop_exit
                _
            $region36: #{_mresconv_impl.3} parent=27 // pred_fallthru
              _
          $region28: #{_mresconv_impl.3} parent=23 // pred_fallthru
            _
          %207 = vnop
        $region24: #{_mresconv_impl.3} parent=19 // pred_fallthru
          _
        // Predicated region
        $region59: #{_mresconv_impl.3} parent=19 // pred_check
          %p208 = pneg %p92
        $region60: #{_mresconv_impl.3} parent=19 // pred_check_branch
          %210 = sbr.rel (%p208) target = $region62
        $region61: #{_mresconv_impl.3} parent=19 // pred_region
          %s211 = smul.u32 2, %s17
          %p212 = scmp.lt.s32.totalorder %s16, 1
          %s213 = scalar_select %p212, %s16, 1
          %p214 = scmp.lt.s32.totalorder %s211, 7
          %s215 = scalar_select %p214, %s211, 7
          %s216 = smul.addr %s213, 8
          %s217 = sadd.s32 %s215, %s216
          %s218 = smul.addr %s217, 4
          %s219 = scalar_lea.vmem %s2, %s218
          %s220 = smul.u32 2, %s17
        $region62: #{_mresconv_impl.3} parent=19 // pred_fallthru
          _
      $region20: #{_mresconv_impl.3} parent=5 // pred_fallthru
        _
      %p221 = scmp.le.s32.totalorder 1, %s9
      %p222 = scmp.lt.s32.totalorder %s9, 9
      %p223 = pnand %p221, %p222
      %p224 = pneg %p223
      // Predicated region
      $region63: #{_mresconv_impl.3} parent=5 // pred_check
        _
      $region64: #{_mresconv_impl.3} parent=5 // pred_check_branch
        %226 = sbr.rel (%p223) target = $region66
      $region65: #{_mresconv_impl.3} parent=5 // pred_region
        %s227 = ssub.s32 %s9, 1
        %s228 = sand.u32 %s36, 1
        %s229 = sand.u32 %s36, 1
        %s230 = smul.addr %s229, 40
        %s231 = scalar_lea.vmem [#allocation3], %s230
        // Predicated region
        $region67: #{_mresconv_impl.3} parent=65 // pred_check
          %p232 = pneg %p49
        $region68: #{_mresconv_impl.3} parent=65 // pred_check_branch
          %234 = sbr.rel (%p232) target = $region70
        $region69: #{_mresconv_impl.3} parent=65 // pred_region
          _
        $region70: #{_mresconv_impl.3} parent=65 // pred_fallthru
          _
        %s235 = sand.u32 %s36, 1
        %s236 = sand.u32 %s36, 1
        %s237 = smul.addr %s236, 40
        %s238 = scalar_lea.vmem [#allocation3], %s237
        %p239 = pneg %p49
        %p240 = pneg %p46
        %p241 = pneg %p70
        %p242 = pneg %p67
        %s243 = smul.u32 2, %s19
        %p244 = scmp.lt.s32.totalorder %s18, 1
        %s245 = scalar_select %p244, %s18, 1
        %p246 = scmp.lt.s32.totalorder %s243, 7
        %s247 = scalar_select %p246, %s243, 7
        %s248 = smul.addr %s245, 8
        %s249 = sadd.s32 %s247, %s248
        %s250 = smul.addr %s249, 4
        %s251 = scalar_lea.vmem %s2, %s250
        %p252 = pneg %p98
        %p253 = pneg %p95
        %p254 = pneg %p126
        %p255 = pneg %p123
        %s256 = smul.u32 2, %s19
        %p257 = scmp.lt.s32.totalorder %s18, 1
        %s258 = scalar_select %p257, %s18, 1
        %p259 = scmp.lt.s32.totalorder %s256, 7
        %s260 = scalar_select %p259, %s256, 7
        %s261 = smul.addr %s258, 8
        %s262 = sadd.s32 %s260, %s261
        %s263 = smul.addr %s262, 8
        %s264 = scalar_lea.vmem %s3, %s263
        %s265 = smul.u32 2, %s19
        %s266 = smul.u32 2, %s19
        %p267 = scmp.lt.s32.totalorder %s18, 1
        %s268 = scalar_select %p267, %s18, 1
        %p269 = scmp.lt.s32.totalorder %s266, 7
        %s270 = scalar_select %p269, %s266, 7
        %s271 = smul.addr %s268, 8
        %s272 = sadd.s32 %s270, %s271
        %s273 = smul.addr %s272, 4
        %s274 = scalar_lea.vmem %s2, %s273
        %s275 = smul.u32 2, %s19
        %s276 = smul.u32 2, %s19
        %p277 = scmp.lt.s32.totalorder %s18, 1
        %s278 = scalar_select %p277, %s18, 1
        %p279 = scmp.lt.s32.totalorder %s276, 7
        %s280 = scalar_select %p279, %s276, 7
        %s281 = smul.addr %s278, 8
        %s282 = sadd.s32 %s280, %s281
        %s283 = smul.addr %s282, 8
        %s284 = scalar_lea.vmem %s3, %s283
        %s285 = smul.u32 2, %s19
        %v287 = vld [vmem:[%s231] sm:$0xff]
        %v289 = vunpack.c.l.b16 %v287
        %v290 = vunpack.c.h.b16 %v287
        %v291 = vpack.c.b16 %v289, %v289
        %v292 = vpack.c.b16 %v290, %v290
        %vm293 = vcmask 1043456
        %v296 = vsel %vm293, %v291, 0
        %v299 = vsel %vm293, %v292, 0
        %301 = vst [vmem:[#allocation2] sm:$0xff] %v296
        %302 = vst [vmem:[#allocation2 + $0x8] sm:$0xff] %v299
        %s303 = scalar_lea.vmem %s231, 8 [#allocation3]
        %v304 = vld [vmem:[%s303] sm:$0xff]
        %v305 = vunpack.c.l.bf16 %v304
        %v306 = vunpack.c.h.bf16 %v304
        %s307 = scalar_lea.vmem %s231, 16 [#allocation3]
        %v308 = vld [vmem:[%s307] sm:$0xff]
        %v309 = vunpack.c.l.bf16 %v308
        %v310 = vunpack.c.h.bf16 %v308
        %s311 = scalar_lea.vmem %s231, 24 [#allocation3]
        %v312 = vld [vmem:[%s311] sm:$0xff]
        %v313 = vunpack.c.l.bf16 %v312
        %v314 = vunpack.c.h.bf16 %v312
        %s315 = scalar_lea.vmem %s231, 32 [#allocation3]
        %v316 = vld [vmem:[%s315] sm:$0xff]
        %v317 = vunpack.c.l.bf16 %v316
        %v318 = vunpack.c.h.bf16 %v316
        %v319 = vsub.f32 %v305, %v313
        %v320 = vsub.f32 %v306, %v314
        %v321 = vand.u32 2147483647, %v319
        %v322 = vand.u32 2147483647, %v320
        %v323 = vpack.c.bf16 %v321, %v321
        %v324 = vpack.c.bf16 %v322, %v322
        %v326 = vsel %vm293, %v323, 0
        %v329 = vsel %vm293, %v324, 0
        %331 = vst [vmem:[#allocation2 + $0x30] sm:$0xff] %v326
        %332 = vst [vmem:[#allocation2 + $0x38] sm:$0xff] %v329
        %v333 = vsub.f32 %v309, %v317
        %v334 = vsub.f32 %v310, %v318
        %v335 = vand.u32 2147483647, %v333
        %v336 = vand.u32 2147483647, %v334
        %v337 = vpack.c.bf16 %v335, %v335
        %v338 = vpack.c.bf16 %v336, %v336
        %v340 = vsel %vm293, %v337, 0
        %v343 = vsel %vm293, %v338, 0
        %345 = vst [vmem:[#allocation2 + $0x40] sm:$0xff] %v340
        %346 = vst [vmem:[#allocation2 + $0x48] sm:$0xff] %v343
        %v347 = vadd.f32 %v305, %v313
        %v348 = vadd.f32 %v306, %v314
        %v349 = vadd.f32 %v309, %v317
        %v350 = vadd.f32 %v310, %v318
        %v351 = vpack.c.bf16 %v347, %v347
        %v352 = vpack.c.bf16 %v348, %v348
        %v354 = vsel %vm293, %v351, 0
        %v357 = vsel %vm293, %v352, 0
        %359 = vst [vmem:[#allocation2 + $0x10] sm:$0xff] %v354
        %360 = vst [vmem:[#allocation2 + $0x18] sm:$0xff] %v357
        %v361 = vpack.c.bf16 %v349, %v349
        %v362 = vpack.c.bf16 %v350, %v350
        %v364 = vsel %vm293, %v361, 0
        %v367 = vsel %vm293, %v362, 0
        %369 = vst [vmem:[#allocation2 + $0x20] sm:$0xff] %v364
        %370 = vst [vmem:[#allocation2 + $0x28] sm:$0xff] %v367
        %v371 = vadd.f32 %v347, %v349
        %v372 = vadd.f32 %v348, %v350
        %v373 = vpack.c.bf16 %v371, %v371
        %v374 = vpack.c.bf16 %v372, %v372
        %v376 = vsel %vm293, %v373, 0
        %v379 = vsel %vm293, %v374, 0
        %381 = vst [vmem:[#allocation2 + $0x50] sm:$0xff] %v376
        %382 = vst [vmem:[#allocation2 + $0x58] sm:$0xff] %v379
        %v383 = vmul.f32 %v371, 0.25
        %v384 = vmul.f32 %v372, 0.25
        %v385 = vsub.f32 %v305, %v383
        %v386 = vsub.f32 %v306, %v384
        %v387 = vsub.f32 %v309, %v383
        %v388 = vsub.f32 %v310, %v384
        %v389 = vsub.f32 %v313, %v383
        %v390 = vsub.f32 %v314, %v384
        %v391 = vsub.f32 %v317, %v383
        %v392 = vsub.f32 %v318, %v384
        %v393 = vmul.f32 %v385, %v385
        %v394 = vmul.f32 %v386, %v386
        %v395 = vmul.f32 %v387, %v387
        %v396 = vmul.f32 %v388, %v388
        %v397 = vadd.f32 %v393, %v395
        %v398 = vadd.f32 %v394, %v396
        %v399 = vmul.f32 %v389, %v389
        %v400 = vmul.f32 %v390, %v390
        %v401 = vadd.f32 %v397, %v399
        %v402 = vadd.f32 %v398, %v400
        %v403 = vmul.f32 %v391, %v391
        %v404 = vmul.f32 %v392, %v392
        %v405 = vadd.f32 %v401, %v403
        %v406 = vadd.f32 %v402, %v404
        %v407 = vpack.c.bf16 %v405, %v405
        %v408 = vpack.c.bf16 %v406, %v406
        %v410 = vsel %vm293, %v407, 0
        %v413 = vsel %vm293, %v408, 0
        %415 = vst [vmem:[#allocation2 + $0x60] sm:$0xff] %v410
        %416 = vst [vmem:[#allocation2 + $0x68] sm:$0xff] %v413
        %v417 = vld [vmem:[%s1] sm:$0xf]
        %v418 = vld [vmem:[#allocation2] sm:$0xff]
        %v419 = vld [vmem:[#allocation2 + $0x8] sm:$0xff]
        %v420 = vld [vmem:[#allocation2 + $0x10] sm:$0xff]
        %v421 = vld [vmem:[#allocation2 + $0x18] sm:$0xff]
        %v422 = vld [vmem:[#allocation2 + $0x20] sm:$0xff]
        %v423 = vld [vmem:[#allocation2 + $0x28] sm:$0xff]
        %v424 = vld [vmem:[#allocation2 + $0x30] sm:$0xff]
        %v425 = vld [vmem:[#allocation2 + $0x38] sm:$0xff]
        %v426 = vld [vmem:[#allocation2 + $0x40] sm:$0xff]
        %v427 = vld [vmem:[#allocation2 + $0x48] sm:$0xff]
        %v428 = vld [vmem:[#allocation2 + $0x50] sm:$0xff]
        %v429 = vld [vmem:[#allocation2 + $0x58] sm:$0xff]
        %v430 = vld [vmem:[#allocation2 + $0x60] sm:$0xff]
        %v431 = vld [vmem:[#allocation2 + $0x68] sm:$0xff]
        %v432 = vld [vmem:[%s274] sm:$0xff]
        %v433 = vunpack.c.l.bf16 %v432
        %v434 = vunpack.c.h.bf16 %v432
        %vm435 = vcmask 916480
        %v437 = vsel %vm435, %v417, 0
        %439 = vmatprep.subr.bf16.mxu0 %v419
        %440 = vmatpush1.bf16.msra.mxu0 %v418
        %441 = vmatprep.subr.bf16.mxu0 %v421
        %442 = vmatpush1.bf16.msra.mxu0 %v420
        %443 = vmatprep.subr.bf16.mxu0 %v423
        %444 = vmatpush1.bf16.msra.mxu0 %v422
        %445 = vmatprep.subr.bf16.mxu0 %v425
        %446 = vmatpush1.bf16.msra.mxu0 %v424
        %447 = vmatprep.subr.bf16.mxu0 %v427
        %448 = vmatpush1.bf16.msra.mxu0 %v426
        %449 = vmatprep.subr.bf16.mxu0 %v429
        %450 = vmatpush1.bf16.msra.mxu0 %v428
        %451 = vmatprep.subr.bf16.mxu0 %v431
        %452 = vmatpush1.bf16.msra.mxu0 %v430
        %453 = vmatprep.subr.bf16.mxu0 0
        %454 = vmatpush1.bf16.msra.mxu0 0
        %455 = vmatprep.subr.bf16.mxu0 0
        %456 = vmatpush1.bf16.msra.mxu0 0
        %457 = vmatprep.subr.bf16.mxu0 0
        %458 = vmatpush1.bf16.msra.mxu0 0
        %459 = vmatprep.subr.bf16.mxu0 0
        %460 = vmatpush1.bf16.msra.mxu0 0
        %461 = vmatprep.subr.bf16.mxu0 0
        %462 = vmatpush1.bf16.msra.mxu0 0
        %463 = vmatprep.subr.bf16.mxu0 0
        %464 = vmatpush1.bf16.msra.mxu0 0
        %465 = vmatprep.subr.bf16.mxu0 0
        %466 = vmatpush1.bf16.msra.mxu0 0
        %467 = vmatprep.subr.bf16.mxu0 0
        %468 = vmatpush1.bf16.msra.mxu0 0
        %469 = vmatprep.subr.bf16.mxu0 0
        %470 = vmatpush1.bf16.msra.mxu0 0
        %471 = vmatprep.mubr.bf16.mxu0 0
        %472 = vmatmul.mubr.bf16.gmra.mrb[0].mxu0 %v437
        %v473 = vpop.f32.mrb[0].mxu0
        %v474 = vadd.f32 %v433, %v473
        %v475 = vpop.f32.mrb[0].mxu0
        %v476 = vadd.f32 %v434, %v475
        %v477 = vpop.f32.mrb[0].mxu0
        %v478 = vpop.f32.mrb[0].mxu0
        %479 = vdwg.mxu0
        %vm480 = vcmp.ge.f32.partialorder %v474, 0.0
        %vm481 = vcmp.ge.f32.partialorder %v476, 0.0
        %v482 = vmul.f32 %v474, 0.01
        %v483 = vmul.f32 %v476, 0.01
        %v484 = vsel %vm480, %v474, %v482
        %v485 = vsel %vm481, %v476, %v483
        %486 = vst [vmem:[%s284] sm:$0xff] %v484
        %487 = vst [vmem:[%s284 + $0x8] sm:$0xff] %v485
        %s488 = smul.u32 2, %s19
        %p489 = scmp.lt.s32.totalorder %s18, 1
        %s490 = scalar_select %p489, %s18, 1
        %p491 = scmp.lt.s32.totalorder %s488, 7
        %s492 = scalar_select %p491, %s488, 7
        %s493 = smul.addr %s490, 8
        %s494 = sadd.s32 %s492, %s493
        %s495 = smul.addr %s494, 8
        %s496 = scalar_lea.vmem %s3, %s495
        // Predicated region
        $region71: #{_mresconv_impl.3} parent=65 // pred_check
          %p497 = pneg %p123
        $region72: #{_mresconv_impl.3} parent=65 // pred_check_branch
          %499 = sbr.rel (%p497) target = $region74
        $region73: #{_mresconv_impl.3} parent=65 // pred_region
          %s500 = smul.u32 2, %s19
        $region74: #{_mresconv_impl.3} parent=65 // pred_fallthru
          _
      $region66: #{_mresconv_impl.3} parent=5 // pred_fallthru
        _
      %p501 = scmp.le.s32.totalorder 2, %s9
      // Predicated region
      $region75: #{_mresconv_impl.3} parent=5 // pred_check
        %p502 = pneg %p501
      $region76: #{_mresconv_impl.3} parent=5 // pred_check_branch
        %504 = sbr.rel (%p502) target = $region78
      $region77: #{_mresconv_impl.3} parent=5 // pred_region
        %s505 = ssub.s32 %s9, 2
        // Predicated region
        $region79: #{_mresconv_impl.3} parent=77 // pred_check
          %p506 = pneg %p129
        $region80: #{_mresconv_impl.3} parent=77 // pred_check_branch
          %508 = sbr.rel (%p506) target = $region82
        $region81: #{_mresconv_impl.3} parent=77 // pred_region
          %s509 = smul.u32 2, %s21
          %p510 = scmp.lt.s32.totalorder %s20, 1
          %s511 = scalar_select %p510, %s20, 1
          %p512 = scmp.lt.s32.totalorder %s509, 7
          %s513 = scalar_select %p512, %s509, 7
          %s514 = smul.addr %s511, 8
          %s515 = sadd.s32 %s513, %s514
          %s516 = smul.addr %s515, 8
          %s517 = scalar_lea.vmem %s3, %s516
        $region82: #{_mresconv_impl.3} parent=77 // pred_fallthru
          _
      $region78: #{_mresconv_impl.3} parent=5 // pred_fallthru
        _
    $region6: #{_mresconv_impl.3} parent=1 // loop_footer
      %s13 = sadd.s32 1, %s9
    $region7: #{_mresconv_impl.3} parent=1 // loop_footer_branch
      %8 = sbr.rel target = $region3
    $region8: #{_mresconv_impl.3} parent=1 // loop_exit
      _

</llo_original>
